<compile_context>
chip_gen: v7x
topology: tpu7x:2x2x1
jax: 0.10.0
libtpu: 0.0.40
codegen_flags: <defaults>
</compile_context>

<pallas_src>
import jax
import jax.numpy as jnp
from jax.experimental import pallas as pl
from jax.experimental.pallas import tpu as pltpu


def _sdp_kernel(qt_ref, k_ref, v_ref, o_ref):
    """One batch element per grid step.

    qt_ref: (1, n, n, n)  q pre-transposed, indexed [., x, c, d]
    k_ref : (1, n, n, n)  indexed [., c, j, d]
    v_ref : (1, n, n, n)  indexed [., x, s, c]
    o_ref : (1, n, n, n)  indexed [., x, s, j]
    """
    qt = qt_ref[0]  # (x, c, d)
    kb = k_ref[0]   # (c, j, d)
    vb = v_ref[0]   # (x, s, c)

    # Contraction 1 (VPU multiply + lane-axis reduce):
    #   qk_t[x, c, j] = sum_d qt[x, c, d] * kb[c, j, d]
    # K = 8, so the MXU would be <1% utilized; the broadcast form also yields the
    # result directly in (x, c, j) order — no in-kernel relayout needed.
    qk_t = jnp.sum(qt[:, :, None, :] * kb[None, :, :, :], axis=-1)  # (x, c, j)

    # Contraction 2 (single canonical batched MXU matmul, batch = x):
    #   out[x, s, j] = sum_c vb[x, s, c] * qk_t[x, c, j]
    out = jax.lax.dot_general(
        vb, qk_t,
        dimension_numbers=(((2,), (1,)), ((0,), (0,))),
        preferred_element_type=jnp.float32,
    )  # (x, s, j)

    o_ref[0] = out.astype(o_ref.dtype)


def _sdp_pallas(q_t, k, v):
    B, n, _, _ = q_t.shape
    blk = (1, n, n, n)
    idx = lambda b: (b, 0, 0, 0)
    flops = 4 * B * n ** 4                 # two contractions, mul+add each
    bytes_accessed = 4 * B * n ** 3 * 4    # 3 f32 inputs + 1 f32 output
    return pl.pallas_call(
        _sdp_kernel,
        out_shape=jax.ShapeDtypeStruct((B, n, n, n), jnp.float32),  # [b, x, s, j]
        grid_spec=pltpu.PrefetchScalarGridSpec(
            num_scalar_prefetch=0,
            grid=(B,),
            in_specs=[
                pl.BlockSpec(blk, idx),   # q_t: [b, x, c, d]
                pl.BlockSpec(blk, idx),   # k  : [b, c, j, d]
                pl.BlockSpec(blk, idx),   # v  : [b, x, s, c]
            ],
            out_specs=pl.BlockSpec(blk, idx),
        ),
        compiler_params=pltpu.CompilerParams(
            dimension_semantics=("parallel",),  # v7x: one batch element per TC
        ),
        cost_estimate=pl.CostEstimate(
            flops=flops, transcendentals=0, bytes_accessed=bytes_accessed),
    )(q_t, k, v)


@jax.jit
def sdp_like(q, k, v, scale_factor=1.0, dropout_p=0.0):
    # scale_factor / dropout_p accepted but unused — exactly like the torch forward.
    del scale_factor, dropout_p
    B, H, S, D = q.shape
    assert k.shape == (B, H, S, D) and v.shape == (B, H, S, D)
    assert H == S == D, "the module's second matmul requires H == S == D"
    # Free XLA-side layout plumbing under jit: q -> [b, x, c, d].
    q_t = jnp.transpose(q, (0, 2, 1, 3))        # (B, S, H, D)
    out = _sdp_pallas(q_t, k, v)                # [b, x, s, j]
    return jnp.transpose(out, (0, 2, 1, 3))     # [b, s, x, j] == torch's permute(0,3,1,2)


def _reference(q, k, v):
    # Pure-JAX mirror of the PyTorch forward (for correctness checking).
    qk = jnp.matmul(q, jnp.swapaxes(k, -2, -1))
    v_ = jnp.transpose(v, (0, 1, 3, 2))
    qk_ = jnp.transpose(qk, (0, 2, 3, 1))
    qkv = jnp.matmul(qk_, v_)
    return jnp.transpose(qkv, (0, 3, 1, 2))


if __name__ == "__main__":
    key = jax.random.PRNGKey(0)
    kq, kk, kv = jax.random.split(key, 3)
    # H == S == D is required for the module's second matmul to be shape-valid;
    # the original torch (2, 3, 8, 8) shapes fail in PyTorch as well.
    B, H, S, D = 2, 8, 8, 8
    q = jax.random.normal(kq, (B, H, S, D), dtype=jnp.float32)
    k = jax.random.normal(kk, (B, H, S, D), dtype=jnp.float32)
    v = jax.random.normal(kv, (B, H, S, D), dtype=jnp.float32)

    out = sdp_like(q, k, v, 1.0, 0.0)
    out = jax.block_until_ready(out)

    ref = _reference(q, k, v)
    assert out.shape == ref.shape == (B, S, H, S)
    assert jnp.allclose(out, ref, atol=1e-4, rtol=1e-4), "mismatch vs reference"
    print("KERNEL_OK")
</pallas_src>

<mosaic_0001>
module attributes {stable_mosaic.version = 11 : i64} {
  func.func @_sdp_kernel(%arg0: i32, %arg1: memref<1x8x8x8xf32, #tpu.memory_space<vmem>>, %arg2: memref<1x8x8x8xf32, #tpu.memory_space<vmem>>, %arg3: memref<1x8x8x8xf32, #tpu.memory_space<vmem>>, %arg4: memref<1x8x8x8xf32, #tpu.memory_space<vmem>>) attributes {dimension_semantics = [#tpu.dimension_semantics<parallel>], iteration_bounds = array<i64: 2>, scalar_prefetch = 0 : i64, scratch_operands = 0 : i64, tpu.core_type = #tpu.core_type<tc>, window_params = [{transform_indices = @transform_0, window_bounds = array<i64: 1, 8, 8, 8>}, {transform_indices = @transform_1, window_bounds = array<i64: 1, 8, 8, 8>}, {transform_indices = @transform_2, window_bounds = array<i64: 1, 8, 8, 8>}, {transform_indices = @transform_3, window_bounds = array<i64: 1, 8, 8, 8>}]} {
    %c0 = arith.constant 0 : index
    %c0_0 = arith.constant 0 : index
    %c0_1 = arith.constant 0 : index
    %c0_2 = arith.constant 0 : index
    %0 = vector.load %arg1[%c0, %c0_0, %c0_1, %c0_2] : memref<1x8x8x8xf32, #tpu.memory_space<vmem>>, vector<1x8x8x8xf32>
    %1 = vector.shape_cast %0 : vector<1x8x8x8xf32> to vector<8x8x8xf32>
    %c0_3 = arith.constant 0 : index
    %c0_4 = arith.constant 0 : index
    %c0_5 = arith.constant 0 : index
    %c0_6 = arith.constant 0 : index
    %2 = vector.load %arg2[%c0_3, %c0_4, %c0_5, %c0_6] : memref<1x8x8x8xf32, #tpu.memory_space<vmem>>, vector<1x8x8x8xf32>
    %3 = vector.shape_cast %2 : vector<1x8x8x8xf32> to vector<8x8x8xf32>
    %c0_7 = arith.constant 0 : index
    %c0_8 = arith.constant 0 : index
    %c0_9 = arith.constant 0 : index
    %c0_10 = arith.constant 0 : index
    %4 = vector.load %arg3[%c0_7, %c0_8, %c0_9, %c0_10] : memref<1x8x8x8xf32, #tpu.memory_space<vmem>>, vector<1x8x8x8xf32>
    %5 = vector.shape_cast %4 : vector<1x8x8x8xf32> to vector<8x8x8xf32>
    %6 = vector.shape_cast %1 : vector<8x8x8xf32> to vector<8x8x1x8xf32>
    %7 = vector.shape_cast %3 : vector<8x8x8xf32> to vector<1x8x8x8xf32>
    %8 = vector.broadcast %6 : vector<8x8x1x8xf32> to vector<8x8x8x8xf32>
    %9 = vector.broadcast %7 : vector<1x8x8x8xf32> to vector<8x8x8x8xf32>
    %10 = arith.mulf %8, %9 : vector<8x8x8x8xf32>
    %cst = arith.constant dense<0.000000e+00> : vector<8x8x8xf32>
    %11 = vector.multi_reduction <add>, %10, %cst [3] : vector<8x8x8x8xf32> to vector<8x8x8xf32>
    %cst_11 = arith.constant dense<0.000000e+00> : vector<8x8x8xf32>
    %12 = tpu.matmul %5, %11, %cst_11 {dimension_numbers = #tpu.dot_dimension_numbers<[2], [1], [1], [2], [0, 0, 0, 1, 1, 2], [0], [0]>} : vector<8x8x8xf32>, vector<8x8x8xf32>, vector<8x8x8xf32> -> vector<8x8x8xf32>
    %c0_12 = arith.constant 0 : index
    %c0_13 = arith.constant 0 : index
    %c0_14 = arith.constant 0 : index
    %c0_15 = arith.constant 0 : index
    %13 = vector.load %arg4[%c0_12, %c0_13, %c0_14, %c0_15] : memref<1x8x8x8xf32, #tpu.memory_space<vmem>>, vector<1x8x8x8xf32>
    %14 = vector.shape_cast %13 : vector<1x8x8x8xf32> to vector<8x8x8xf32>
    %15 = vector.shape_cast %12 : vector<8x8x8xf32> to vector<1x8x8x8xf32>
    tpu.vector_store %arg4[%c0_12, %c0_13, %c0_14, %c0_15], %15 {strides = array<i32>} : memref<1x8x8x8xf32, #tpu.memory_space<vmem>>, vector<1x8x8x8xf32>,
    return
  }
  func.func @transform_0(%arg0: i32) -> (i32, i32, i32, i32) {
    %c0_i32 = arith.constant 0 : i32
    %c0_i32_0 = arith.constant 0 : i32
    %c0_i32_1 = arith.constant 0 : i32
    %c0_i32_2 = arith.constant 0 : i32
    return %arg0, %c0_i32, %c0_i32_0, %c0_i32_1 : i32, i32, i32, i32
  }
  func.func @transform_1(%arg0: i32) -> (i32, i32, i32, i32) {
    %c0_i32 = arith.constant 0 : i32
    %c0_i32_0 = arith.constant 0 : i32
    %c0_i32_1 = arith.constant 0 : i32
    %c0_i32_2 = arith.constant 0 : i32
    return %arg0, %c0_i32, %c0_i32_0, %c0_i32_1 : i32, i32, i32, i32
  }
  func.func @transform_2(%arg0: i32) -> (i32, i32, i32, i32) {
    %c0_i32 = arith.constant 0 : i32
    %c0_i32_0 = arith.constant 0 : i32
    %c0_i32_1 = arith.constant 0 : i32
    %c0_i32_2 = arith.constant 0 : i32
    return %arg0, %c0_i32, %c0_i32_0, %c0_i32_1 : i32, i32, i32, i32
  }
  func.func @transform_3(%arg0: i32) -> (i32, i32, i32, i32) {
    %c0_i32 = arith.constant 0 : i32
    %c0_i32_0 = arith.constant 0 : i32
    %c0_i32_1 = arith.constant 0 : i32
    %c0_i32_2 = arith.constant 0 : i32
    return %arg0, %c0_i32, %c0_i32_0, %c0_i32_1 : i32, i32, i32, i32
  }
}

</mosaic_0001>

<llo_original>
// kernel: sdp_like.1
$region0: #{sdp_like.1}
  #allocation0 [shape = 'u32[]', space=smem, size = 0x4, offset = 0x4, fixed_abs, tag = 'smem constant byte address 0x4 - core index']
  #allocation1 [shape = 'u32[144,128]{1,0:T(1,128)}', space=vmem, size = 0x12000, scoped, tag = 'internal scratch']
  %s0 = inlined_call_operand.vmem [shape: f32[2,8,8,8], index: 0, kind: input, shape index: {}]
  %s1 = inlined_call_operand.vmem [shape: f32[2,8,8,8], index: 1, kind: input, shape index: {}]
  %s2 = inlined_call_operand.vmem [shape: f32[2,8,8,8], index: 2, kind: input, shape index: {}]
  %s3 = inlined_call_operand.vmem [shape: f32[2,8,8,8], index: 3, kind: output, shape index: {}]
  %s4 = sld [smem:[#allocation0]]
  $region45: #{sdp_like.1} parent=0
    _
  %s6 = ssub.s32 1, %s4
  %s7 = scalar_select 0, %s6, %s4
  loop: start=0, step=1, limit=4
  $region2: #{sdp_like.1} parent=0 // loop_pre_header
    _
  $region3: #{sdp_like.1} parent=0 // loop_header
    %s9 = sphi 0, %s13
    %p10 = scmp.ge.s32.totalorder %s9, 4
    %s19 = sphi 0, %s21
    %s22 = sphi 0, %s19
    %s23 = sphi 0, %s22
    %s39 = sphi 0, %s23
    %s45 = sphi 0, %s47
    %s48 = sphi 0, %s45
    %s49 = sphi 0, %s48
    %s65 = sphi 0, %s49
    %s71 = sphi 0, %s73
    %s74 = sphi 0, %s71
    %s75 = sphi 0, %s74
    %s91 = sphi 0, %s75
    %s97 = sphi 0, %s99
    %s100 = sphi 0, %s97
    %s101 = sphi 0, %s100
    %s117 = sphi 0, %s101
  $region4: #{sdp_like.1} parent=0 // loop_header_branch
    %12 = sbr.rel (%p10) target = $region8
  $region5: #{sdp_like.1} parent=0 // loop_body
    %s14 = ssub.s32 %s9, 1
    %s15 = ssub.s32 %s9, 2
    %s16 = sadd.s32 %s9, 1
    %s17 = ssub.s32 %s9, %s16
    %p18 = scmp.eq.s32.totalorder %s17, 0
    %s20 = sadd.s32 %s19, 1
    %s21 = scalar_select %p18, %s19, %s20
    %p24 = pneg %p18
    %p25 = scmp.eq.s32.totalorder %s9, 1
    %p26 = por %p24, %p25
    %p27 = scmp.ne.s32.totalorder %s19, %s22
    %p28 = scmp.eq.s32.totalorder %s9, 0
    %p29 = por %p27, %p28
    %p30 = scmp.ne.s32.totalorder %s19, %s22
    %p31 = scmp.eq.s32.totalorder %s14, 1
    %p32 = por %p30, %p31
    %p33 = scmp.ne.s32.totalorder %s22, %s23
    %p34 = scmp.eq.s32.totalorder %s14, 0
    %p35 = por %p33, %p34
    %p36 = scmp.ne.s32.totalorder %s22, %s23
    %p37 = scmp.eq.s32.totalorder %s15, 1
    %p38 = por %p36, %p37
    %p40 = scmp.ne.s32.totalorder %s23, %s39
    %p41 = scmp.eq.s32.totalorder %s15, 0
    %p42 = por %p40, %p41
    %s43 = ssub.s32 %s9, %s16
    %p44 = scmp.eq.s32.totalorder %s43, 0
    %s46 = sadd.s32 %s45, 1
    %s47 = scalar_select %p44, %s45, %s46
    %p50 = pneg %p44
    %p51 = scmp.eq.s32.totalorder %s9, 1
    %p52 = por %p50, %p51
    %p53 = scmp.ne.s32.totalorder %s45, %s48
    %p54 = scmp.eq.s32.totalorder %s9, 0
    %p55 = por %p53, %p54
    %p56 = scmp.ne.s32.totalorder %s45, %s48
    %p57 = scmp.eq.s32.totalorder %s14, 1
    %p58 = por %p56, %p57
    %p59 = scmp.ne.s32.totalorder %s48, %s49
    %p60 = scmp.eq.s32.totalorder %s14, 0
    %p61 = por %p59, %p60
    %p62 = scmp.ne.s32.totalorder %s48, %s49
    %p63 = scmp.eq.s32.totalorder %s15, 1
    %p64 = por %p62, %p63
    %p66 = scmp.ne.s32.totalorder %s49, %s65
    %p67 = scmp.eq.s32.totalorder %s15, 0
    %p68 = por %p66, %p67
    %s69 = ssub.s32 %s9, %s16
    %p70 = scmp.eq.s32.totalorder %s69, 0
    %s72 = sadd.s32 %s71, 1
    %s73 = scalar_select %p70, %s71, %s72
    %p76 = pneg %p70
    %p77 = scmp.eq.s32.totalorder %s9, 1
    %p78 = por %p76, %p77
    %p79 = scmp.ne.s32.totalorder %s71, %s74
    %p80 = scmp.eq.s32.totalorder %s9, 0
    %p81 = por %p79, %p80
    %p82 = scmp.ne.s32.totalorder %s71, %s74
    %p83 = scmp.eq.s32.totalorder %s14, 1
    %p84 = por %p82, %p83
    %p85 = scmp.ne.s32.totalorder %s74, %s75
    %p86 = scmp.eq.s32.totalorder %s14, 0
    %p87 = por %p85, %p86
    %p88 = scmp.ne.s32.totalorder %s74, %s75
    %p89 = scmp.eq.s32.totalorder %s15, 1
    %p90 = por %p88, %p89
    %p92 = scmp.ne.s32.totalorder %s75, %s91
    %p93 = scmp.eq.s32.totalorder %s15, 0
    %p94 = por %p92, %p93
    %s95 = ssub.s32 %s9, %s16
    %p96 = scmp.eq.s32.totalorder %s95, 0
    %s98 = sadd.s32 %s97, 1
    %s99 = scalar_select %p96, %s97, %s98
    %p102 = pneg %p96
    %p103 = scmp.eq.s32.totalorder %s9, 1
    %p104 = por %p102, %p103
    %p105 = scmp.ne.s32.totalorder %s97, %s100
    %p106 = scmp.eq.s32.totalorder %s9, 0
    %p107 = por %p105, %p106
    %p108 = scmp.ne.s32.totalorder %s97, %s100
    %p109 = scmp.eq.s32.totalorder %s14, 1
    %p110 = por %p108, %p109
    %p111 = scmp.ne.s32.totalorder %s100, %s101
    %p112 = scmp.eq.s32.totalorder %s14, 0
    %p113 = por %p111, %p112
    %p114 = scmp.ne.s32.totalorder %s100, %s101
    %p115 = scmp.eq.s32.totalorder %s15, 1
    %p116 = por %p114, %p115
    %p118 = scmp.ne.s32.totalorder %s101, %s117
    %p119 = scmp.eq.s32.totalorder %s15, 0
    %p120 = por %p118, %p119
    %p121 = scmp.le.s32.totalorder 1, %s9
    %p122 = scmp.lt.s32.totalorder %s9, 3
    %p123 = pnand %p121, %p122
    %p124 = pneg %p123
    // Predicated region
    $region9: #{sdp_like.1} parent=5 // pred_check
      _
    $region10: #{sdp_like.1} parent=5 // pred_check_branch
      %126 = sbr.rel (%p123) target = $region12
    $region11: #{sdp_like.1} parent=5 // pred_region
      %s127 = ssub.s32 %s9, 1
    $region12: #{sdp_like.1} parent=5 // pred_fallthru
      _
    %p128 = scmp.lt.s32.totalorder %s9, 2
    // Predicated region
    $region13: #{sdp_like.1} parent=5 // pred_check
      %p129 = pneg %p128
    $region14: #{sdp_like.1} parent=5 // pred_check_branch
      %131 = sbr.rel (%p129) target = $region16
    $region15: #{sdp_like.1} parent=5 // pred_region
      // Predicated region
      $region17: #{sdp_like.1} parent=15 // pred_check
        %p132 = pneg %p29
      $region18: #{sdp_like.1} parent=15 // pred_check_branch
        %134 = sbr.rel (%p132) target = $region20
      $region19: #{sdp_like.1} parent=15 // pred_region
        %p135 = scmp.lt.s32.totalorder %s9, 1
        %s136 = scalar_select %p135, %s9, 1
        %s137 = smul.addr %s136, 8
        %s138 = smul.addr %s137, 8
        %s139 = scalar_lea.vmem %s0, %s138
      $region20: #{sdp_like.1} parent=15 // pred_fallthru
        _
      // Predicated region
      $region21: #{sdp_like.1} parent=15 // pred_check
        %p140 = pneg %p55
      $region22: #{sdp_like.1} parent=15 // pred_check_branch
        %142 = sbr.rel (%p140) target = $region24
      $region23: #{sdp_like.1} parent=15 // pred_region
        %p143 = scmp.lt.s32.totalorder %s9, 1
        %s144 = scalar_select %p143, %s9, 1
        %s145 = smul.addr %s144, 8
        %s146 = smul.addr %s145, 8
        %s147 = scalar_lea.vmem %s1, %s146
      $region24: #{sdp_like.1} parent=15 // pred_fallthru
        _
      // Predicated region
      $region25: #{sdp_like.1} parent=15 // pred_check
        %p148 = pneg %p81
      $region26: #{sdp_like.1} parent=15 // pred_check_branch
        %150 = sbr.rel (%p148) target = $region28
      $region27: #{sdp_like.1} parent=15 // pred_region
        %p151 = scmp.lt.s32.totalorder %s9, 1
        %s152 = scalar_select %p151, %s9, 1
        %s153 = smul.addr %s152, 8
        %s154 = smul.addr %s153, 8
        %s155 = scalar_lea.vmem %s2, %s154
      $region28: #{sdp_like.1} parent=15 // pred_fallthru
        _
    $region16: #{sdp_like.1} parent=5 // pred_fallthru
      _
    %p156 = scmp.le.s32.totalorder 1, %s9
    %p157 = scmp.lt.s32.totalorder %s9, 3
    %p158 = pnand %p156, %p157
    %p159 = pneg %p158
    // Predicated region
    $region29: #{sdp_like.1} parent=5 // pred_check
      _
    $region30: #{sdp_like.1} parent=5 // pred_check_branch
      %161 = sbr.rel (%p158) target = $region32
    $region31: #{sdp_like.1} parent=5 // pred_region
      %s162 = ssub.s32 %s9, 1
      %p163 = scmp.lt.s32.totalorder %s14, 1
      %s164 = scalar_select %p163, %s14, 1
      %s165 = smul.addr %s164, 8
      %s166 = smul.addr %s165, 8
      %s167 = scalar_lea.vmem %s0, %s166
      %p168 = pneg %p35
      %p169 = pneg %p32
      %p170 = scmp.lt.s32.totalorder %s14, 1
      %s171 = scalar_select %p170, %s14, 1
      %s172 = smul.addr %s171, 8
      %s173 = smul.addr %s172, 8
      %s174 = scalar_lea.vmem %s1, %s173
      %p175 = pneg %p61
      %p176 = pneg %p58
      %p177 = scmp.lt.s32.totalorder %s14, 1
      %s178 = scalar_select %p177, %s14, 1
      %s179 = smul.addr %s178, 8
      %s180 = smul.addr %s179, 8
      %s181 = scalar_lea.vmem %s2, %s180
      %p182 = pneg %p87
      %p183 = pneg %p84
      %p184 = pneg %p113
      %p185 = pneg %p110
      %p186 = scmp.lt.s32.totalorder %s14, 1
      %s187 = scalar_select %p186, %s14, 1
      %s188 = smul.addr %s187, 8
      %s189 = smul.addr %s188, 8
      %s190 = scalar_lea.vmem %s3, %s189
      %p191 = scmp.lt.s32.totalorder %s14, 1
      %s192 = scalar_select %p191, %s14, 1
      %s193 = smul.addr %s192, 8
      %s194 = smul.addr %s193, 8
      %s195 = scalar_lea.vmem %s0, %s194
      %p196 = scmp.lt.s32.totalorder %s14, 1
      %s197 = scalar_select %p196, %s14, 1
      %s198 = smul.addr %s197, 8
      %s199 = smul.addr %s198, 8
      %s200 = scalar_lea.vmem %s1, %s199
      %p201 = scmp.lt.s32.totalorder %s14, 1
      %s202 = scalar_select %p201, %s14, 1
      %s203 = smul.addr %s202, 8
      %s204 = smul.addr %s203, 8
      %s205 = scalar_lea.vmem %s2, %s204
      %p206 = scmp.lt.s32.totalorder %s14, 1
      %s207 = scalar_select %p206, %s14, 1
      %s208 = smul.addr %s207, 8
      %s209 = smul.addr %s208, 8
      %s210 = scalar_lea.vmem %s3, %s209
      %v211 = vld [vmem:[%s195] sm:$0xff]
      %v212 = vld [vmem:[%s195 + $0x8] sm:$0xff]
      %v213 = vld [vmem:[%s195 + $0x10] sm:$0xff]
      %v214 = vld [vmem:[%s195 + $0x18] sm:$0xff]
      %v215 = vld [vmem:[%s195 + $0x20] sm:$0xff]
      %v216 = vld [vmem:[%s195 + $0x28] sm:$0xff]
      %v217 = vld [vmem:[%s195 + $0x30] sm:$0xff]
      %v218 = vld [vmem:[%s195 + $0x38] sm:$0xff]
      %v219 = vld [vmem:[%s200] sm:$0xff]
      %v220 = vld [vmem:[%s200 + $0x8] sm:$0xff]
      %v221 = vld [vmem:[%s200 + $0x10] sm:$0xff]
      %v222 = vld [vmem:[%s200 + $0x18] sm:$0xff]
      %v223 = vld [vmem:[%s200 + $0x20] sm:$0xff]
      %v224 = vld [vmem:[%s200 + $0x28] sm:$0xff]
      %v225 = vld [vmem:[%s200 + $0x30] sm:$0xff]
      %v226 = vld [vmem:[%s200 + $0x38] sm:$0xff]
      %v227 = vld [vmem:[%s205] sm:$0xff]
      %v228 = vld [vmem:[%s205 + $0x8] sm:$0xff]
      %v229 = vld [vmem:[%s205 + $0x10] sm:$0xff]
      %v230 = vld [vmem:[%s205 + $0x18] sm:$0xff]
      %v231 = vld [vmem:[%s205 + $0x20] sm:$0xff]
      %v232 = vld [vmem:[%s205 + $0x28] sm:$0xff]
      %v233 = vld [vmem:[%s205 + $0x30] sm:$0xff]
      %v234 = vld [vmem:[%s205 + $0x38] sm:$0xff]
      %v243 = vcombine.high %v211, %v211
      %v245 = vunpack.c.l.s4 1966171168
      %v246 = vunpack.c.0.s8 %v245
      %v247 = vlaneseq
      %v248 = vshrl.u32 %v247, 7
      %v249 = vsub.s32 %v246, %v248
      %v250 = vrot.slane %v211, %v249
      %v252 = vunpack.c.l.s4 1966171168
      %v253 = vunpack.c.0.s8 %v252
      %v254 = vlaneseq
      %v255 = vshrl.u32 %v254, 7
      %v256 = vsub.s32 %v253, %v255
      %v257 = vrot.slane %v243, %v256
      %v258 = vcombine.high %v250, %v250
      %v259 = vcombine.high %v257, %v257
      %v261 = vunpack.c.l.s4 1966171168
      %v262 = vunpack.c.0.s8 %v261
      %v263 = vlaneseq
      %v264 = vshrl.u32 %v263, 7
      %v265 = vsub.s32 %v262, %v264
      %v266 = vrot.slane %v250, %v265
      %v268 = vunpack.c.l.s4 1966171168
      %v269 = vunpack.c.0.s8 %v268
      %v270 = vlaneseq
      %v271 = vshrl.u32 %v270, 7
      %v272 = vsub.s32 %v269, %v271
      %v273 = vrot.slane %v257, %v272
      %v275 = vunpack.c.l.s4 1966171168
      %v276 = vunpack.c.0.s8 %v275
      %v277 = vlaneseq
      %v278 = vshrl.u32 %v277, 7
      %v279 = vsub.s32 %v276, %v278
      %v280 = vrot.slane %v258, %v279
      %v282 = vunpack.c.l.s4 1966171168
      %v283 = vunpack.c.0.s8 %v282
      %v284 = vlaneseq
      %v285 = vshrl.u32 %v284, 7
      %v286 = vsub.s32 %v283, %v285
      %v287 = vrot.slane %v259, %v286
      %v288 = vcombine.high %v266, %v266
      %v289 = vcombine.high %v273, %v273
      %v290 = vcombine.high %v280, %v280
      %v291 = vcombine.high %v287, %v287
      %v292 = vcombine.high %v212, %v212
      %v294 = vunpack.c.l.s4 1966171168
      %v295 = vunpack.c.0.s8 %v294
      %v296 = vlaneseq
      %v297 = vshrl.u32 %v296, 7
      %v298 = vsub.s32 %v295, %v297
      %v299 = vrot.slane %v212, %v298
      %v301 = vunpack.c.l.s4 1966171168
      %v302 = vunpack.c.0.s8 %v301
      %v303 = vlaneseq
      %v304 = vshrl.u32 %v303, 7
      %v305 = vsub.s32 %v302, %v304
      %v306 = vrot.slane %v292, %v305
      %v307 = vcombine.high %v299, %v299
      %v308 = vcombine.high %v306, %v306
      %v310 = vunpack.c.l.s4 1966171168
      %v311 = vunpack.c.0.s8 %v310
      %v312 = vlaneseq
      %v313 = vshrl.u32 %v312, 7
      %v314 = vsub.s32 %v311, %v313
      %v315 = vrot.slane %v299, %v314
      %v317 = vunpack.c.l.s4 1966171168
      %v318 = vunpack.c.0.s8 %v317
      %v319 = vlaneseq
      %v320 = vshrl.u32 %v319, 7
      %v321 = vsub.s32 %v318, %v320
      %v322 = vrot.slane %v306, %v321
      %v324 = vunpack.c.l.s4 1966171168
      %v325 = vunpack.c.0.s8 %v324
      %v326 = vlaneseq
      %v327 = vshrl.u32 %v326, 7
      %v328 = vsub.s32 %v325, %v327
      %v329 = vrot.slane %v307, %v328
      %v331 = vunpack.c.l.s4 1966171168
      %v332 = vunpack.c.0.s8 %v331
      %v333 = vlaneseq
      %v334 = vshrl.u32 %v333, 7
      %v335 = vsub.s32 %v332, %v334
      %v336 = vrot.slane %v308, %v335
      %v337 = vcombine.high %v315, %v315
      %v338 = vcombine.high %v322, %v322
      %v339 = vcombine.high %v329, %v329
      %v340 = vcombine.high %v336, %v336
      %v341 = vcombine.high %v213, %v213
      %v343 = vunpack.c.l.s4 1966171168
      %v344 = vunpack.c.0.s8 %v343
      %v345 = vlaneseq
      %v346 = vshrl.u32 %v345, 7
      %v347 = vsub.s32 %v344, %v346
      %v348 = vrot.slane %v213, %v347
      %v350 = vunpack.c.l.s4 1966171168
      %v351 = vunpack.c.0.s8 %v350
      %v352 = vlaneseq
      %v353 = vshrl.u32 %v352, 7
      %v354 = vsub.s32 %v351, %v353
      %v355 = vrot.slane %v341, %v354
      %v356 = vcombine.high %v348, %v348
      %v357 = vcombine.high %v355, %v355
      %v359 = vunpack.c.l.s4 1966171168
      %v360 = vunpack.c.0.s8 %v359
      %v361 = vlaneseq
      %v362 = vshrl.u32 %v361, 7
      %v363 = vsub.s32 %v360, %v362
      %v364 = vrot.slane %v348, %v363
      %v366 = vunpack.c.l.s4 1966171168
      %v367 = vunpack.c.0.s8 %v366
      %v368 = vlaneseq
      %v369 = vshrl.u32 %v368, 7
      %v370 = vsub.s32 %v367, %v369
      %v371 = vrot.slane %v355, %v370
      %v373 = vunpack.c.l.s4 1966171168
      %v374 = vunpack.c.0.s8 %v373
      %v375 = vlaneseq
      %v376 = vshrl.u32 %v375, 7
      %v377 = vsub.s32 %v374, %v376
      %v378 = vrot.slane %v356, %v377
      %v380 = vunpack.c.l.s4 1966171168
      %v381 = vunpack.c.0.s8 %v380
      %v382 = vlaneseq
      %v383 = vshrl.u32 %v382, 7
      %v384 = vsub.s32 %v381, %v383
      %v385 = vrot.slane %v357, %v384
      %v386 = vcombine.high %v364, %v364
      %v387 = vcombine.high %v371, %v371
      %v388 = vcombine.high %v378, %v378
      %v389 = vcombine.high %v385, %v385
      %v390 = vcombine.high %v214, %v214
      %v392 = vunpack.c.l.s4 1966171168
      %v393 = vunpack.c.0.s8 %v392
      %v394 = vlaneseq
      %v395 = vshrl.u32 %v394, 7
      %v396 = vsub.s32 %v393, %v395
      %v397 = vrot.slane %v214, %v396
      %v399 = vunpack.c.l.s4 1966171168
      %v400 = vunpack.c.0.s8 %v399
      %v401 = vlaneseq
      %v402 = vshrl.u32 %v401, 7
      %v403 = vsub.s32 %v400, %v402
      %v404 = vrot.slane %v390, %v403
      %v405 = vcombine.high %v397, %v397
      %v406 = vcombine.high %v404, %v404
      %v408 = vunpack.c.l.s4 1966171168
      %v409 = vunpack.c.0.s8 %v408
      %v410 = vlaneseq
      %v411 = vshrl.u32 %v410, 7
      %v412 = vsub.s32 %v409, %v411
      %v413 = vrot.slane %v397, %v412
      %v415 = vunpack.c.l.s4 1966171168
      %v416 = vunpack.c.0.s8 %v415
      %v417 = vlaneseq
      %v418 = vshrl.u32 %v417, 7
      %v419 = vsub.s32 %v416, %v418
      %v420 = vrot.slane %v404, %v419
      %v422 = vunpack.c.l.s4 1966171168
      %v423 = vunpack.c.0.s8 %v422
      %v424 = vlaneseq
      %v425 = vshrl.u32 %v424, 7
      %v426 = vsub.s32 %v423, %v425
      %v427 = vrot.slane %v405, %v426
      %v429 = vunpack.c.l.s4 1966171168
      %v430 = vunpack.c.0.s8 %v429
      %v431 = vlaneseq
      %v432 = vshrl.u32 %v431, 7
      %v433 = vsub.s32 %v430, %v432
      %v434 = vrot.slane %v406, %v433
      %v435 = vcombine.high %v413, %v413
      %v436 = vcombine.high %v420, %v420
      %v437 = vcombine.high %v427, %v427
      %v438 = vcombine.high %v434, %v434
      %v439 = vcombine.high %v215, %v215
      %v441 = vunpack.c.l.s4 1966171168
      %v442 = vunpack.c.0.s8 %v441
      %v443 = vlaneseq
      %v444 = vshrl.u32 %v443, 7
      %v445 = vsub.s32 %v442, %v444
      %v446 = vrot.slane %v215, %v445
      %v448 = vunpack.c.l.s4 1966171168
      %v449 = vunpack.c.0.s8 %v448
      %v450 = vlaneseq
      %v451 = vshrl.u32 %v450, 7
      %v452 = vsub.s32 %v449, %v451
      %v453 = vrot.slane %v439, %v452
      %v454 = vcombine.high %v446, %v446
      %v455 = vcombine.high %v453, %v453
      %v457 = vunpack.c.l.s4 1966171168
      %v458 = vunpack.c.0.s8 %v457
      %v459 = vlaneseq
      %v460 = vshrl.u32 %v459, 7
      %v461 = vsub.s32 %v458, %v460
      %v462 = vrot.slane %v446, %v461
      %v464 = vunpack.c.l.s4 1966171168
      %v465 = vunpack.c.0.s8 %v464
      %v466 = vlaneseq
      %v467 = vshrl.u32 %v466, 7
      %v468 = vsub.s32 %v465, %v467
      %v469 = vrot.slane %v453, %v468
      %v471 = vunpack.c.l.s4 1966171168
      %v472 = vunpack.c.0.s8 %v471
      %v473 = vlaneseq
      %v474 = vshrl.u32 %v473, 7
      %v475 = vsub.s32 %v472, %v474
      %v476 = vrot.slane %v454, %v475
      %v478 = vunpack.c.l.s4 1966171168
      %v479 = vunpack.c.0.s8 %v478
      %v480 = vlaneseq
      %v481 = vshrl.u32 %v480, 7
      %v482 = vsub.s32 %v479, %v481
      %v483 = vrot.slane %v455, %v482
      %v484 = vcombine.high %v462, %v462
      %v485 = vcombine.high %v469, %v469
      %v486 = vcombine.high %v476, %v476
      %v487 = vcombine.high %v483, %v483
      %v488 = vcombine.high %v216, %v216
      %v490 = vunpack.c.l.s4 1966171168
      %v491 = vunpack.c.0.s8 %v490
      %v492 = vlaneseq
      %v493 = vshrl.u32 %v492, 7
      %v494 = vsub.s32 %v491, %v493
      %v495 = vrot.slane %v216, %v494
      %v497 = vunpack.c.l.s4 1966171168
      %v498 = vunpack.c.0.s8 %v497
      %v499 = vlaneseq
      %v500 = vshrl.u32 %v499, 7
      %v501 = vsub.s32 %v498, %v500
      %v502 = vrot.slane %v488, %v501
      %v503 = vcombine.high %v495, %v495
      %v504 = vcombine.high %v502, %v502
      %v506 = vunpack.c.l.s4 1966171168
      %v507 = vunpack.c.0.s8 %v506
      %v508 = vlaneseq
      %v509 = vshrl.u32 %v508, 7
      %v510 = vsub.s32 %v507, %v509
      %v511 = vrot.slane %v495, %v510
      %v513 = vunpack.c.l.s4 1966171168
      %v514 = vunpack.c.0.s8 %v513
      %v515 = vlaneseq
      %v516 = vshrl.u32 %v515, 7
      %v517 = vsub.s32 %v514, %v516
      %v518 = vrot.slane %v502, %v517
      %v520 = vunpack.c.l.s4 1966171168
      %v521 = vunpack.c.0.s8 %v520
      %v522 = vlaneseq
      %v523 = vshrl.u32 %v522, 7
      %v524 = vsub.s32 %v521, %v523
      %v525 = vrot.slane %v503, %v524
      %v527 = vunpack.c.l.s4 1966171168
      %v528 = vunpack.c.0.s8 %v527
      %v529 = vlaneseq
      %v530 = vshrl.u32 %v529, 7
      %v531 = vsub.s32 %v528, %v530
      %v532 = vrot.slane %v504, %v531
      %v533 = vcombine.high %v511, %v511
      %v534 = vcombine.high %v518, %v518
      %v535 = vcombine.high %v525, %v525
      %v536 = vcombine.high %v532, %v532
      %v537 = vcombine.high %v217, %v217
      %v539 = vunpack.c.l.s4 1966171168
      %v540 = vunpack.c.0.s8 %v539
      %v541 = vlaneseq
      %v542 = vshrl.u32 %v541, 7
      %v543 = vsub.s32 %v540, %v542
      %v544 = vrot.slane %v217, %v543
      %v546 = vunpack.c.l.s4 1966171168
      %v547 = vunpack.c.0.s8 %v546
      %v548 = vlaneseq
      %v549 = vshrl.u32 %v548, 7
      %v550 = vsub.s32 %v547, %v549
      %v551 = vrot.slane %v537, %v550
      %v552 = vcombine.high %v544, %v544
      %v553 = vcombine.high %v551, %v551
      %v555 = vunpack.c.l.s4 1966171168
      %v556 = vunpack.c.0.s8 %v555
      %v557 = vlaneseq
      %v558 = vshrl.u32 %v557, 7
      %v559 = vsub.s32 %v556, %v558
      %v560 = vrot.slane %v544, %v559
      %v562 = vunpack.c.l.s4 1966171168
      %v563 = vunpack.c.0.s8 %v562
      %v564 = vlaneseq
      %v565 = vshrl.u32 %v564, 7
      %v566 = vsub.s32 %v563, %v565
      %v567 = vrot.slane %v551, %v566
      %v569 = vunpack.c.l.s4 1966171168
      %v570 = vunpack.c.0.s8 %v569
      %v571 = vlaneseq
      %v572 = vshrl.u32 %v571, 7
      %v573 = vsub.s32 %v570, %v572
      %v574 = vrot.slane %v552, %v573
      %v576 = vunpack.c.l.s4 1966171168
      %v577 = vunpack.c.0.s8 %v576
      %v578 = vlaneseq
      %v579 = vshrl.u32 %v578, 7
      %v580 = vsub.s32 %v577, %v579
      %v581 = vrot.slane %v553, %v580
      %v582 = vcombine.high %v560, %v560
      %v583 = vcombine.high %v567, %v567
      %v584 = vcombine.high %v574, %v574
      %v585 = vcombine.high %v581, %v581
      %v586 = vcombine.high %v218, %v218
      %v588 = vunpack.c.l.s4 1966171168
      %v589 = vunpack.c.0.s8 %v588
      %v590 = vlaneseq
      %v591 = vshrl.u32 %v590, 7
      %v592 = vsub.s32 %v589, %v591
      %v593 = vrot.slane %v218, %v592
      %v595 = vunpack.c.l.s4 1966171168
      %v596 = vunpack.c.0.s8 %v595
      %v597 = vlaneseq
      %v598 = vshrl.u32 %v597, 7
      %v599 = vsub.s32 %v596, %v598
      %v600 = vrot.slane %v586, %v599
      %v601 = vcombine.high %v593, %v593
      %v602 = vcombine.high %v600, %v600
      %v604 = vunpack.c.l.s4 1966171168
      %v605 = vunpack.c.0.s8 %v604
      %v606 = vlaneseq
      %v607 = vshrl.u32 %v606, 7
      %v608 = vsub.s32 %v605, %v607
      %v609 = vrot.slane %v593, %v608
      %v611 = vunpack.c.l.s4 1966171168
      %v612 = vunpack.c.0.s8 %v611
      %v613 = vlaneseq
      %v614 = vshrl.u32 %v613, 7
      %v615 = vsub.s32 %v612, %v614
      %v616 = vrot.slane %v600, %v615
      %v618 = vunpack.c.l.s4 1966171168
      %v619 = vunpack.c.0.s8 %v618
      %v620 = vlaneseq
      %v621 = vshrl.u32 %v620, 7
      %v622 = vsub.s32 %v619, %v621
      %v623 = vrot.slane %v601, %v622
      %v625 = vunpack.c.l.s4 1966171168
      %v626 = vunpack.c.0.s8 %v625
      %v627 = vlaneseq
      %v628 = vshrl.u32 %v627, 7
      %v629 = vsub.s32 %v626, %v628
      %v630 = vrot.slane %v602, %v629
      %v631 = vcombine.high %v609, %v609
      %v632 = vcombine.high %v616, %v616
      %v633 = vcombine.high %v623, %v623
      %v634 = vcombine.high %v630, %v630
      %v635 = vlaneseq
      %v636 = vshrl.u32 %v635, 7
      %v637 = vsub.s32 0, %v636
      %v638 = vrot.slane %v266, %v637
      %v639 = vlaneseq
      %v640 = vshrl.u32 %v639, 7
      %v641 = vsub.s32 0, %v640
      %v642 = vrot.slane %v280, %v641
      %v643 = vlaneseq
      %v644 = vshrl.u32 %v643, 7
      %v645 = vsub.s32 0, %v644
      %v646 = vrot.slane %v288, %v645
      %v647 = vlaneseq
      %v648 = vshrl.u32 %v647, 7
      %v649 = vsub.s32 0, %v648
      %v650 = vrot.slane %v290, %v649
      %v651 = vlaneseq
      %v652 = vshrl.u32 %v651, 7
      %v653 = vsub.s32 0, %v652
      %v654 = vrot.slane %v273, %v653
      %v655 = vlaneseq
      %v656 = vshrl.u32 %v655, 7
      %v657 = vsub.s32 0, %v656
      %v658 = vrot.slane %v287, %v657
      %v659 = vlaneseq
      %v660 = vshrl.u32 %v659, 7
      %v661 = vsub.s32 0, %v660
      %v662 = vrot.slane %v289, %v661
      %v663 = vlaneseq
      %v664 = vshrl.u32 %v663, 7
      %v665 = vsub.s32 0, %v664
      %v666 = vrot.slane %v291, %v665
      %v667 = vlaneseq
      %v668 = vshrl.u32 %v667, 7
      %v669 = vsub.s32 0, %v668
      %v670 = vrot.slane %v315, %v669
      %v671 = vlaneseq
      %v672 = vshrl.u32 %v671, 7
      %v673 = vsub.s32 0, %v672
      %v674 = vrot.slane %v329, %v673
      %v675 = vlaneseq
      %v676 = vshrl.u32 %v675, 7
      %v677 = vsub.s32 0, %v676
      %v678 = vrot.slane %v337, %v677
      %v679 = vlaneseq
      %v680 = vshrl.u32 %v679, 7
      %v681 = vsub.s32 0, %v680
      %v682 = vrot.slane %v339, %v681
      %v683 = vlaneseq
      %v684 = vshrl.u32 %v683, 7
      %v685 = vsub.s32 0, %v684
      %v686 = vrot.slane %v322, %v685
      %v687 = vlaneseq
      %v688 = vshrl.u32 %v687, 7
      %v689 = vsub.s32 0, %v688
      %v690 = vrot.slane %v336, %v689
      %v691 = vlaneseq
      %v692 = vshrl.u32 %v691, 7
      %v693 = vsub.s32 0, %v692
      %v694 = vrot.slane %v338, %v693
      %v695 = vlaneseq
      %v696 = vshrl.u32 %v695, 7
      %v697 = vsub.s32 0, %v696
      %v698 = vrot.slane %v340, %v697
      %v699 = vlaneseq
      %v700 = vshrl.u32 %v699, 7
      %v701 = vsub.s32 0, %v700
      %v702 = vrot.slane %v364, %v701
      %v703 = vlaneseq
      %v704 = vshrl.u32 %v703, 7
      %v705 = vsub.s32 0, %v704
      %v706 = vrot.slane %v378, %v705
      %v707 = vlaneseq
      %v708 = vshrl.u32 %v707, 7
      %v709 = vsub.s32 0, %v708
      %v710 = vrot.slane %v386, %v709
      %v711 = vlaneseq
      %v712 = vshrl.u32 %v711, 7
      %v713 = vsub.s32 0, %v712
      %v714 = vrot.slane %v388, %v713
      %v715 = vlaneseq
      %v716 = vshrl.u32 %v715, 7
      %v717 = vsub.s32 0, %v716
      %v718 = vrot.slane %v371, %v717
      %v719 = vlaneseq
      %v720 = vshrl.u32 %v719, 7
      %v721 = vsub.s32 0, %v720
      %v722 = vrot.slane %v385, %v721
      %v723 = vlaneseq
      %v724 = vshrl.u32 %v723, 7
      %v725 = vsub.s32 0, %v724
      %v726 = vrot.slane %v387, %v725
      %v727 = vlaneseq
      %v728 = vshrl.u32 %v727, 7
      %v729 = vsub.s32 0, %v728
      %v730 = vrot.slane %v389, %v729
      %v731 = vlaneseq
      %v732 = vshrl.u32 %v731, 7
      %v733 = vsub.s32 0, %v732
      %v734 = vrot.slane %v413, %v733
      %v735 = vlaneseq
      %v736 = vshrl.u32 %v735, 7
      %v737 = vsub.s32 0, %v736
      %v738 = vrot.slane %v427, %v737
      %v739 = vlaneseq
      %v740 = vshrl.u32 %v739, 7
      %v741 = vsub.s32 0, %v740
      %v742 = vrot.slane %v435, %v741
      %v743 = vlaneseq
      %v744 = vshrl.u32 %v743, 7
      %v745 = vsub.s32 0, %v744
      %v746 = vrot.slane %v437, %v745
      %v747 = vlaneseq
      %v748 = vshrl.u32 %v747, 7
      %v749 = vsub.s32 0, %v748
      %v750 = vrot.slane %v420, %v749
      %v751 = vlaneseq
      %v752 = vshrl.u32 %v751, 7
      %v753 = vsub.s32 0, %v752
      %v754 = vrot.slane %v434, %v753
      %v755 = vlaneseq
      %v756 = vshrl.u32 %v755, 7
      %v757 = vsub.s32 0, %v756
      %v758 = vrot.slane %v436, %v757
      %v759 = vlaneseq
      %v760 = vshrl.u32 %v759, 7
      %v761 = vsub.s32 0, %v760
      %v762 = vrot.slane %v438, %v761
      %v763 = vlaneseq
      %v764 = vshrl.u32 %v763, 7
      %v765 = vsub.s32 0, %v764
      %v766 = vrot.slane %v462, %v765
      %v767 = vlaneseq
      %v768 = vshrl.u32 %v767, 7
      %v769 = vsub.s32 0, %v768
      %v770 = vrot.slane %v476, %v769
      %v771 = vlaneseq
      %v772 = vshrl.u32 %v771, 7
      %v773 = vsub.s32 0, %v772
      %v774 = vrot.slane %v484, %v773
      %v775 = vlaneseq
      %v776 = vshrl.u32 %v775, 7
      %v777 = vsub.s32 0, %v776
      %v778 = vrot.slane %v486, %v777
      %v779 = vlaneseq
      %v780 = vshrl.u32 %v779, 7
      %v781 = vsub.s32 0, %v780
      %v782 = vrot.slane %v469, %v781
      %v783 = vlaneseq
      %v784 = vshrl.u32 %v783, 7
      %v785 = vsub.s32 0, %v784
      %v786 = vrot.slane %v483, %v785
      %v787 = vlaneseq
      %v788 = vshrl.u32 %v787, 7
      %v789 = vsub.s32 0, %v788
      %v790 = vrot.slane %v485, %v789
      %v791 = vlaneseq
      %v792 = vshrl.u32 %v791, 7
      %v793 = vsub.s32 0, %v792
      %v794 = vrot.slane %v487, %v793
      %v795 = vlaneseq
      %v796 = vshrl.u32 %v795, 7
      %v797 = vsub.s32 0, %v796
      %v798 = vrot.slane %v511, %v797
      %v799 = vlaneseq
      %v800 = vshrl.u32 %v799, 7
      %v801 = vsub.s32 0, %v800
      %v802 = vrot.slane %v525, %v801
      %v803 = vlaneseq
      %v804 = vshrl.u32 %v803, 7
      %v805 = vsub.s32 0, %v804
      %v806 = vrot.slane %v533, %v805
      %v807 = vlaneseq
      %v808 = vshrl.u32 %v807, 7
      %v809 = vsub.s32 0, %v808
      %v810 = vrot.slane %v535, %v809
      %v811 = vlaneseq
      %v812 = vshrl.u32 %v811, 7
      %v813 = vsub.s32 0, %v812
      %v814 = vrot.slane %v518, %v813
      %v815 = vlaneseq
      %v816 = vshrl.u32 %v815, 7
      %v817 = vsub.s32 0, %v816
      %v818 = vrot.slane %v532, %v817
      %v819 = vlaneseq
      %v820 = vshrl.u32 %v819, 7
      %v821 = vsub.s32 0, %v820
      %v822 = vrot.slane %v534, %v821
      %v823 = vlaneseq
      %v824 = vshrl.u32 %v823, 7
      %v825 = vsub.s32 0, %v824
      %v826 = vrot.slane %v536, %v825
      %v827 = vlaneseq
      %v828 = vshrl.u32 %v827, 7
      %v829 = vsub.s32 0, %v828
      %v830 = vrot.slane %v560, %v829
      %v831 = vlaneseq
      %v832 = vshrl.u32 %v831, 7
      %v833 = vsub.s32 0, %v832
      %v834 = vrot.slane %v574, %v833
      %v835 = vlaneseq
      %v836 = vshrl.u32 %v835, 7
      %v837 = vsub.s32 0, %v836
      %v838 = vrot.slane %v582, %v837
      %v839 = vlaneseq
      %v840 = vshrl.u32 %v839, 7
      %v841 = vsub.s32 0, %v840
      %v842 = vrot.slane %v584, %v841
      %v843 = vlaneseq
      %v844 = vshrl.u32 %v843, 7
      %v845 = vsub.s32 0, %v844
      %v846 = vrot.slane %v567, %v845
      %v847 = vlaneseq
      %v848 = vshrl.u32 %v847, 7
      %v849 = vsub.s32 0, %v848
      %v850 = vrot.slane %v581, %v849
      %v851 = vlaneseq
      %v852 = vshrl.u32 %v851, 7
      %v853 = vsub.s32 0, %v852
      %v854 = vrot.slane %v583, %v853
      %v855 = vlaneseq
      %v856 = vshrl.u32 %v855, 7
      %v857 = vsub.s32 0, %v856
      %v858 = vrot.slane %v585, %v857
      %v859 = vlaneseq
      %v860 = vshrl.u32 %v859, 7
      %v861 = vsub.s32 0, %v860
      %v862 = vrot.slane %v609, %v861
      %v863 = vlaneseq
      %v864 = vshrl.u32 %v863, 7
      %v865 = vsub.s32 0, %v864
      %v866 = vrot.slane %v623, %v865
      %v867 = vlaneseq
      %v868 = vshrl.u32 %v867, 7
      %v869 = vsub.s32 0, %v868
      %v870 = vrot.slane %v631, %v869
      %v871 = vlaneseq
      %v872 = vshrl.u32 %v871, 7
      %v873 = vsub.s32 0, %v872
      %v874 = vrot.slane %v633, %v873
      %v875 = vlaneseq
      %v876 = vshrl.u32 %v875, 7
      %v877 = vsub.s32 0, %v876
      %v878 = vrot.slane %v616, %v877
      %v879 = vlaneseq
      %v880 = vshrl.u32 %v879, 7
      %v881 = vsub.s32 0, %v880
      %v882 = vrot.slane %v630, %v881
      %v883 = vlaneseq
      %v884 = vshrl.u32 %v883, 7
      %v885 = vsub.s32 0, %v884
      %v886 = vrot.slane %v632, %v885
      %v887 = vlaneseq
      %v888 = vshrl.u32 %v887, 7
      %v889 = vsub.s32 0, %v888
      %v890 = vrot.slane %v634, %v889
      %v955 = vmul.f32 %v638, %v219
      %v956 = vmul.f32 %v642, %v220
      %v957 = vmul.f32 %v646, %v221
      %v958 = vmul.f32 %v650, %v222
      %v959 = vmul.f32 %v654, %v223
      %v960 = vmul.f32 %v658, %v224
      %v961 = vmul.f32 %v662, %v225
      %v962 = vmul.f32 %v666, %v226
      %v963 = vmul.f32 %v670, %v219
      %v964 = vmul.f32 %v674, %v220
      %v965 = vmul.f32 %v678, %v221
      %v966 = vmul.f32 %v682, %v222
      %v967 = vmul.f32 %v686, %v223
      %v968 = vmul.f32 %v690, %v224
      %v969 = vmul.f32 %v694, %v225
      %v970 = vmul.f32 %v698, %v226
      %v971 = vmul.f32 %v702, %v219
      %v972 = vmul.f32 %v706, %v220
      %v973 = vmul.f32 %v710, %v221
      %v974 = vmul.f32 %v714, %v222
      %v975 = vmul.f32 %v718, %v223
      %v976 = vmul.f32 %v722, %v224
      %v977 = vmul.f32 %v726, %v225
      %v978 = vmul.f32 %v730, %v226
      %v979 = vmul.f32 %v734, %v219
      %v980 = vmul.f32 %v738, %v220
      %v981 = vmul.f32 %v742, %v221
      %v982 = vmul.f32 %v746, %v222
      %v983 = vmul.f32 %v750, %v223
      %v984 = vmul.f32 %v754, %v224
      %v985 = vmul.f32 %v758, %v225
      %v986 = vmul.f32 %v762, %v226
      %v987 = vmul.f32 %v766, %v219
      %v988 = vmul.f32 %v770, %v220
      %v989 = vmul.f32 %v774, %v221
      %v990 = vmul.f32 %v778, %v222
      %v991 = vmul.f32 %v782, %v223
      %v992 = vmul.f32 %v786, %v224
      %v993 = vmul.f32 %v790, %v225
      %v994 = vmul.f32 %v794, %v226
      %v995 = vmul.f32 %v798, %v219
      %v996 = vmul.f32 %v802, %v220
      %v997 = vmul.f32 %v806, %v221
      %v998 = vmul.f32 %v810, %v222
      %v999 = vmul.f32 %v814, %v223
      %v1000 = vmul.f32 %v818, %v224
      %v1001 = vmul.f32 %v822, %v225
      %v1002 = vmul.f32 %v826, %v226
      %v1003 = vmul.f32 %v830, %v219
      %v1004 = vmul.f32 %v834, %v220
      %v1005 = vmul.f32 %v838, %v221
      %v1006 = vmul.f32 %v842, %v222
      %v1007 = vmul.f32 %v846, %v223
      %v1008 = vmul.f32 %v850, %v224
      %v1009 = vmul.f32 %v854, %v225
      %v1010 = vmul.f32 %v858, %v226
      %v1011 = vmul.f32 %v862, %v219
      %v1012 = vmul.f32 %v866, %v220
      %v1013 = vmul.f32 %v870, %v221
      %v1014 = vmul.f32 %v874, %v222
      %v1015 = vmul.f32 %v878, %v223
      %v1016 = vmul.f32 %v882, %v224
      %v1017 = vmul.f32 %v886, %v225
      %v1018 = vmul.f32 %v890, %v226
      %vm1019 = vcmask 64512
      %v1020 = vsel %vm1019, %v955, 0.0
      %1021 = vadd.xlane.f32.xlu0 %v1020
      %v1022 = vpop.xlane.xlu0 %1021
      %v1023 = vsel %vm1019, %v956, 0.0
      %1024 = vadd.xlane.f32.xlu0 %v1023
      %v1025 = vpop.xlane.xlu0 %1024
      %v1026 = vsel %vm1019, %v957, 0.0
      %1027 = vadd.xlane.f32.xlu0 %v1026
      %v1028 = vpop.xlane.xlu0 %1027
      %v1029 = vsel %vm1019, %v958, 0.0
      %1030 = vadd.xlane.f32.xlu0 %v1029
      %v1031 = vpop.xlane.xlu0 %1030
      %v1032 = vsel %vm1019, %v959, 0.0
      %1033 = vadd.xlane.f32.xlu0 %v1032
      %v1034 = vpop.xlane.xlu0 %1033
      %v1035 = vsel %vm1019, %v960, 0.0
      %1036 = vadd.xlane.f32.xlu0 %v1035
      %v1037 = vpop.xlane.xlu0 %1036
      %v1038 = vsel %vm1019, %v961, 0.0
      %1039 = vadd.xlane.f32.xlu0 %v1038
      %v1040 = vpop.xlane.xlu0 %1039
      %v1041 = vsel %vm1019, %v962, 0.0
      %1042 = vadd.xlane.f32.xlu0 %v1041
      %v1043 = vpop.xlane.xlu0 %1042
      %v1044 = vsel %vm1019, %v963, 0.0
      %1045 = vadd.xlane.f32.xlu0 %v1044
      %v1046 = vpop.xlane.xlu0 %1045
      %v1047 = vsel %vm1019, %v964, 0.0
      %1048 = vadd.xlane.f32.xlu0 %v1047
      %v1049 = vpop.xlane.xlu0 %1048
      %v1050 = vsel %vm1019, %v965, 0.0
      %1051 = vadd.xlane.f32.xlu0 %v1050
      %v1052 = vpop.xlane.xlu0 %1051
      %v1053 = vsel %vm1019, %v966, 0.0
      %1054 = vadd.xlane.f32.xlu0 %v1053
      %v1055 = vpop.xlane.xlu0 %1054
      %v1056 = vsel %vm1019, %v967, 0.0
      %1057 = vadd.xlane.f32.xlu0 %v1056
      %v1058 = vpop.xlane.xlu0 %1057
      %v1059 = vsel %vm1019, %v968, 0.0
      %1060 = vadd.xlane.f32.xlu0 %v1059
      %v1061 = vpop.xlane.xlu0 %1060
      %v1062 = vsel %vm1019, %v969, 0.0
      %1063 = vadd.xlane.f32.xlu0 %v1062
      %v1064 = vpop.xlane.xlu0 %1063
      %v1065 = vsel %vm1019, %v970, 0.0
      %1066 = vadd.xlane.f32.xlu0 %v1065
      %v1067 = vpop.xlane.xlu0 %1066
      %v1068 = vsel %vm1019, %v971, 0.0
      %1069 = vadd.xlane.f32.xlu0 %v1068
      %v1070 = vpop.xlane.xlu0 %1069
      %v1071 = vsel %vm1019, %v972, 0.0
      %1072 = vadd.xlane.f32.xlu0 %v1071
      %v1073 = vpop.xlane.xlu0 %1072
      %v1074 = vsel %vm1019, %v973, 0.0
      %1075 = vadd.xlane.f32.xlu0 %v1074
      %v1076 = vpop.xlane.xlu0 %1075
      %v1077 = vsel %vm1019, %v974, 0.0
      %1078 = vadd.xlane.f32.xlu0 %v1077
      %v1079 = vpop.xlane.xlu0 %1078
      %v1080 = vsel %vm1019, %v975, 0.0
      %1081 = vadd.xlane.f32.xlu0 %v1080
      %v1082 = vpop.xlane.xlu0 %1081
      %v1083 = vsel %vm1019, %v976, 0.0
      %1084 = vadd.xlane.f32.xlu0 %v1083
      %v1085 = vpop.xlane.xlu0 %1084
      %v1086 = vsel %vm1019, %v977, 0.0
      %1087 = vadd.xlane.f32.xlu0 %v1086
      %v1088 = vpop.xlane.xlu0 %1087
      %v1089 = vsel %vm1019, %v978, 0.0
      %1090 = vadd.xlane.f32.xlu0 %v1089
      %v1091 = vpop.xlane.xlu0 %1090
      %v1092 = vsel %vm1019, %v979, 0.0
      %1093 = vadd.xlane.f32.xlu0 %v1092
      %v1094 = vpop.xlane.xlu0 %1093
      %v1095 = vsel %vm1019, %v980, 0.0
      %1096 = vadd.xlane.f32.xlu0 %v1095
      %v1097 = vpop.xlane.xlu0 %1096
      %v1098 = vsel %vm1019, %v981, 0.0
      %1099 = vadd.xlane.f32.xlu0 %v1098
      %v1100 = vpop.xlane.xlu0 %1099
      %v1101 = vsel %vm1019, %v982, 0.0
      %1102 = vadd.xlane.f32.xlu0 %v1101
      %v1103 = vpop.xlane.xlu0 %1102
      %v1104 = vsel %vm1019, %v983, 0.0
      %1105 = vadd.xlane.f32.xlu0 %v1104
      %v1106 = vpop.xlane.xlu0 %1105
      %v1107 = vsel %vm1019, %v984, 0.0
      %1108 = vadd.xlane.f32.xlu0 %v1107
      %v1109 = vpop.xlane.xlu0 %1108
      %v1110 = vsel %vm1019, %v985, 0.0
      %1111 = vadd.xlane.f32.xlu0 %v1110
      %v1112 = vpop.xlane.xlu0 %1111
      %v1113 = vsel %vm1019, %v986, 0.0
      %1114 = vadd.xlane.f32.xlu0 %v1113
      %v1115 = vpop.xlane.xlu0 %1114
      %v1116 = vsel %vm1019, %v987, 0.0
      %1117 = vadd.xlane.f32.xlu0 %v1116
      %v1118 = vpop.xlane.xlu0 %1117
      %v1119 = vsel %vm1019, %v988, 0.0
      %1120 = vadd.xlane.f32.xlu0 %v1119
      %v1121 = vpop.xlane.xlu0 %1120
      %v1122 = vsel %vm1019, %v989, 0.0
      %1123 = vadd.xlane.f32.xlu0 %v1122
      %v1124 = vpop.xlane.xlu0 %1123
      %v1125 = vsel %vm1019, %v990, 0.0
      %1126 = vadd.xlane.f32.xlu0 %v1125
      %v1127 = vpop.xlane.xlu0 %1126
      %v1128 = vsel %vm1019, %v991, 0.0
      %1129 = vadd.xlane.f32.xlu0 %v1128
      %v1130 = vpop.xlane.xlu0 %1129
      %v1131 = vsel %vm1019, %v992, 0.0
      %1132 = vadd.xlane.f32.xlu0 %v1131
      %v1133 = vpop.xlane.xlu0 %1132
      %v1134 = vsel %vm1019, %v993, 0.0
      %1135 = vadd.xlane.f32.xlu0 %v1134
      %v1136 = vpop.xlane.xlu0 %1135
      %v1137 = vsel %vm1019, %v994, 0.0
      %1138 = vadd.xlane.f32.xlu0 %v1137
      %v1139 = vpop.xlane.xlu0 %1138
      %v1140 = vsel %vm1019, %v995, 0.0
      %1141 = vadd.xlane.f32.xlu0 %v1140
      %v1142 = vpop.xlane.xlu0 %1141
      %v1143 = vsel %vm1019, %v996, 0.0
      %1144 = vadd.xlane.f32.xlu0 %v1143
      %v1145 = vpop.xlane.xlu0 %1144
      %v1146 = vsel %vm1019, %v997, 0.0
      %1147 = vadd.xlane.f32.xlu0 %v1146
      %v1148 = vpop.xlane.xlu0 %1147
      %v1149 = vsel %vm1019, %v998, 0.0
      %1150 = vadd.xlane.f32.xlu0 %v1149
      %v1151 = vpop.xlane.xlu0 %1150
      %v1152 = vsel %vm1019, %v999, 0.0
      %1153 = vadd.xlane.f32.xlu0 %v1152
      %v1154 = vpop.xlane.xlu0 %1153
      %v1155 = vsel %vm1019, %v1000, 0.0
      %1156 = vadd.xlane.f32.xlu0 %v1155
      %v1157 = vpop.xlane.xlu0 %1156
      %v1158 = vsel %vm1019, %v1001, 0.0
      %1159 = vadd.xlane.f32.xlu0 %v1158
      %v1160 = vpop.xlane.xlu0 %1159
      %v1161 = vsel %vm1019, %v1002, 0.0
      %1162 = vadd.xlane.f32.xlu0 %v1161
      %v1163 = vpop.xlane.xlu0 %1162
      %v1164 = vsel %vm1019, %v1003, 0.0
      %1165 = vadd.xlane.f32.xlu0 %v1164
      %v1166 = vpop.xlane.xlu0 %1165
      %v1167 = vsel %vm1019, %v1004, 0.0
      %1168 = vadd.xlane.f32.xlu0 %v1167
      %v1169 = vpop.xlane.xlu0 %1168
      %v1170 = vsel %vm1019, %v1005, 0.0
      %1171 = vadd.xlane.f32.xlu0 %v1170
      %v1172 = vpop.xlane.xlu0 %1171
      %v1173 = vsel %vm1019, %v1006, 0.0
      %1174 = vadd.xlane.f32.xlu0 %v1173
      %v1175 = vpop.xlane.xlu0 %1174
      %v1176 = vsel %vm1019, %v1007, 0.0
      %1177 = vadd.xlane.f32.xlu0 %v1176
      %v1178 = vpop.xlane.xlu0 %1177
      %v1179 = vsel %vm1019, %v1008, 0.0
      %1180 = vadd.xlane.f32.xlu0 %v1179
      %v1181 = vpop.xlane.xlu0 %1180
      %v1182 = vsel %vm1019, %v1009, 0.0
      %1183 = vadd.xlane.f32.xlu0 %v1182
      %v1184 = vpop.xlane.xlu0 %1183
      %v1185 = vsel %vm1019, %v1010, 0.0
      %1186 = vadd.xlane.f32.xlu0 %v1185
      %v1187 = vpop.xlane.xlu0 %1186
      %v1188 = vsel %vm1019, %v1011, 0.0
      %1189 = vadd.xlane.f32.xlu0 %v1188
      %v1190 = vpop.xlane.xlu0 %1189
      %v1191 = vsel %vm1019, %v1012, 0.0
      %1192 = vadd.xlane.f32.xlu0 %v1191
      %v1193 = vpop.xlane.xlu0 %1192
      %v1194 = vsel %vm1019, %v1013, 0.0
      %1195 = vadd.xlane.f32.xlu0 %v1194
      %v1196 = vpop.xlane.xlu0 %1195
      %v1197 = vsel %vm1019, %v1014, 0.0
      %1198 = vadd.xlane.f32.xlu0 %v1197
      %v1199 = vpop.xlane.xlu0 %1198
      %v1200 = vsel %vm1019, %v1015, 0.0
      %1201 = vadd.xlane.f32.xlu0 %v1200
      %v1202 = vpop.xlane.xlu0 %1201
      %v1203 = vsel %vm1019, %v1016, 0.0
      %1204 = vadd.xlane.f32.xlu0 %v1203
      %v1205 = vpop.xlane.xlu0 %1204
      %v1206 = vsel %vm1019, %v1017, 0.0
      %1207 = vadd.xlane.f32.xlu0 %v1206
      %v1208 = vpop.xlane.xlu0 %1207
      %v1209 = vsel %vm1019, %v1018, 0.0
      %1210 = vadd.xlane.f32.xlu0 %v1209
      %v1211 = vpop.xlane.xlu0 %1210
      %v1220 = vlaneseq
      %v1221 = vand.u32 %v1220, 127
      %v1222 = vlaneseq
      %v1223 = vshrl.u32 %v1222, 7
      %v1224 = vsub.s32 %v1221, %v1223
      %v1225 = vrot.slane %v1022, %v1224
      %v1226 = vlaneseq
      %v1227 = vshrl.u32 %v1226, 7
      %v1228 = vsub.s32 %v1221, %v1227
      %v1229 = vrot.slane %v1025, %v1228
      %v1230 = vlaneseq
      %v1231 = vshrl.u32 %v1230, 7
      %v1232 = vsub.s32 %v1221, %v1231
      %v1233 = vrot.slane %v1028, %v1232
      %v1234 = vlaneseq
      %v1235 = vshrl.u32 %v1234, 7
      %v1236 = vsub.s32 %v1221, %v1235
      %v1237 = vrot.slane %v1031, %v1236
      %v1238 = vlaneseq
      %v1239 = vshrl.u32 %v1238, 7
      %v1240 = vsub.s32 %v1221, %v1239
      %v1241 = vrot.slane %v1034, %v1240
      %v1242 = vlaneseq
      %v1243 = vshrl.u32 %v1242, 7
      %v1244 = vsub.s32 %v1221, %v1243
      %v1245 = vrot.slane %v1037, %v1244
      %v1246 = vlaneseq
      %v1247 = vshrl.u32 %v1246, 7
      %v1248 = vsub.s32 %v1221, %v1247
      %v1249 = vrot.slane %v1040, %v1248
      %v1250 = vlaneseq
      %v1251 = vshrl.u32 %v1250, 7
      %v1252 = vsub.s32 %v1221, %v1251
      %v1253 = vrot.slane %v1043, %v1252
      %vm1254 = vcmask 1041409
      %v1255 = vsel %vm1254, %v1229, %v1225
      %vm1256 = vcmask 1042434
      %v1257 = vsel %vm1256, %v1233, %v1255
      %vm1258 = vcmask 1043459
      %v1259 = vsel %vm1258, %v1237, %v1257
      %vm1260 = vcmask 1044484
      %v1261 = vsel %vm1260, %v1241, %v1259
      %vm1262 = vcmask 1045509
      %v1263 = vsel %vm1262, %v1245, %v1261
      %vm1264 = vcmask 1046534
      %v1265 = vsel %vm1264, %v1249, %v1263
      %vm1266 = vcmask 1047559
      %v1267 = vsel %vm1266, %v1253, %v1265
      %v1270 = vsel %vm1019, %v227, 0
      %1272 = vmatprep.subr.mxu0 0.0
      %1273 = vmatpush1.msra.mxu0 %v1267
      %1274 = vmatprep.subr.mxu0 0.0
      %1275 = vmatpush1.msra.mxu0 0.0
      %1276 = vmatprep.subr.mxu0 0.0
      %1277 = vmatpush1.msra.mxu0 0.0
      %1278 = vmatprep.subr.mxu0 0.0
      %1279 = vmatpush1.msra.mxu0 0.0
      %1280 = vmatprep.subr.mxu0 0.0
      %1281 = vmatpush1.msra.mxu0 0.0
      %1282 = vmatprep.subr.mxu0 0.0
      %1283 = vmatpush1.msra.mxu0 0.0
      %1284 = vmatprep.subr.mxu0 0.0
      %1285 = vmatpush1.msra.mxu0 0.0
      %1286 = vmatprep.subr.mxu0 0.0
      %1287 = vmatpush1.msra.mxu0 0.0
      %1288 = vmatprep.subr.mxu0 0.0
      %1289 = vmatpush1.msra.mxu0 0.0
      %1290 = vmatprep.subr.mxu0 0.0
      %1291 = vmatpush1.msra.mxu0 0.0
      %1292 = vmatprep.subr.mxu0 0.0
      %1293 = vmatpush1.msra.mxu0 0.0
      %1294 = vmatprep.subr.mxu0 0.0
      %1295 = vmatpush1.msra.mxu0 0.0
      %1296 = vmatprep.subr.mxu0 0.0
      %1297 = vmatpush1.msra.mxu0 0.0
      %1298 = vmatprep.subr.mxu0 0.0
      %1299 = vmatpush1.msra.mxu0 0.0
      %1300 = vmatprep.subr.mxu0 0.0
      %1301 = vmatpush1.msra.mxu0 0.0
      %1302 = vmatprep.subr.mxu0 0.0
      %1303 = vmatpush1.msra.mxu0 0.0
      %1304 = vmatprep.subr.mxu0 0.0
      %1305 = vmatpush1.msra.mxu0 0.0
      %1306 = vmatprep.subr.mxu0 0.0
      %1307 = vmatpush1.msra.mxu0 0.0
      %1308 = vmatprep.subr.mxu0 0.0
      %1309 = vmatpush1.msra.mxu0 0.0
      %1310 = vmatprep.subr.mxu0 0.0
      %1311 = vmatpush1.msra.mxu0 0.0
      %1312 = vmatprep.subr.mxu0 0.0
      %1313 = vmatpush1.msra.mxu0 0.0
      %1314 = vmatprep.subr.mxu0 0.0
      %1315 = vmatpush1.msra.mxu0 0.0
      %1316 = vmatprep.subr.mxu0 0.0
      %1317 = vmatpush1.msra.mxu0 0.0
      %1318 = vmatprep.subr.mxu0 0.0
      %1319 = vmatpush1.msra.mxu0 0.0
      %1320 = vmatprep.subr.mxu0 0.0
      %1321 = vmatpush1.msra.mxu0 0.0
      %1322 = vmatprep.subr.mxu0 0.0
      %1323 = vmatpush1.msra.mxu0 0.0
      %1324 = vmatprep.subr.mxu0 0.0
      %1325 = vmatpush1.msra.mxu0 0.0
      %1326 = vmatprep.subr.mxu0 0.0
      %1327 = vmatpush1.msra.mxu0 0.0
      %1328 = vmatprep.subr.mxu0 0.0
      %1329 = vmatpush1.msra.mxu0 0.0
      %1330 = vmatprep.subr.mxu0 0.0
      %1331 = vmatpush1.msra.mxu0 0.0
      %1332 = vmatprep.subr.mxu0 0.0
      %1333 = vmatpush1.msra.mxu0 0.0
      %1334 = vmatprep.subr.mxu0 0.0
      %1335 = vmatpush1.msra.mxu0 0.0
      %1336 = vmatprep.mubr.f32.mxu0 0.0
      %1337 = vmatmul.mubr.f32.gmra.mrb[0].mxu0 %v1270
      %v1338 = vpop.f32.mrb[0].mxu0
      %v1339 = vadd.f32 0.0, %v1338
      %v1340 = vpop.f32.mrb[0].mxu0
      %1341 = vdwg.mxu0
      %v1350 = vlaneseq
      %v1351 = vshrl.u32 %v1350, 7
      %v1352 = vsub.s32 %v1221, %v1351
      %v1353 = vrot.slane %v1046, %v1352
      %v1354 = vlaneseq
      %v1355 = vshrl.u32 %v1354, 7
      %v1356 = vsub.s32 %v1221, %v1355
      %v1357 = vrot.slane %v1049, %v1356
      %v1358 = vlaneseq
      %v1359 = vshrl.u32 %v1358, 7
      %v1360 = vsub.s32 %v1221, %v1359
      %v1361 = vrot.slane %v1052, %v1360
      %v1362 = vlaneseq
      %v1363 = vshrl.u32 %v1362, 7
      %v1364 = vsub.s32 %v1221, %v1363
      %v1365 = vrot.slane %v1055, %v1364
      %v1366 = vlaneseq
      %v1367 = vshrl.u32 %v1366, 7
      %v1368 = vsub.s32 %v1221, %v1367
      %v1369 = vrot.slane %v1058, %v1368
      %v1370 = vlaneseq
      %v1371 = vshrl.u32 %v1370, 7
      %v1372 = vsub.s32 %v1221, %v1371
      %v1373 = vrot.slane %v1061, %v1372
      %v1374 = vlaneseq
      %v1375 = vshrl.u32 %v1374, 7
      %v1376 = vsub.s32 %v1221, %v1375
      %v1377 = vrot.slane %v1064, %v1376
      %v1378 = vlaneseq
      %v1379 = vshrl.u32 %v1378, 7
      %v1380 = vsub.s32 %v1221, %v1379
      %v1381 = vrot.slane %v1067, %v1380
      %v1382 = vsel %vm1254, %v1357, %v1353
      %v1383 = vsel %vm1256, %v1361, %v1382
      %v1384 = vsel %vm1258, %v1365, %v1383
      %v1385 = vsel %vm1260, %v1369, %v1384
      %v1386 = vsel %vm1262, %v1373, %v1385
      %v1387 = vsel %vm1264, %v1377, %v1386
      %v1388 = vsel %vm1266, %v1381, %v1387
      %v1391 = vsel %vm1019, %v228, 0
      %1393 = vmatprep.subr.mxu0 0.0
      %1394 = vmatpush1.msra.mxu0 %v1388
      %1395 = vmatprep.subr.mxu0 0.0
      %1396 = vmatpush1.msra.mxu0 0.0
      %1397 = vmatprep.subr.mxu0 0.0
      %1398 = vmatpush1.msra.mxu0 0.0
      %1399 = vmatprep.subr.mxu0 0.0
      %1400 = vmatpush1.msra.mxu0 0.0
      %1401 = vmatprep.subr.mxu0 0.0
      %1402 = vmatpush1.msra.mxu0 0.0
      %1403 = vmatprep.subr.mxu0 0.0
      %1404 = vmatpush1.msra.mxu0 0.0
      %1405 = vmatprep.subr.mxu0 0.0
      %1406 = vmatpush1.msra.mxu0 0.0
      %1407 = vmatprep.subr.mxu0 0.0
      %1408 = vmatpush1.msra.mxu0 0.0
      %1409 = vmatprep.subr.mxu0 0.0
      %1410 = vmatpush1.msra.mxu0 0.0
      %1411 = vmatprep.subr.mxu0 0.0
      %1412 = vmatpush1.msra.mxu0 0.0
      %1413 = vmatprep.subr.mxu0 0.0
      %1414 = vmatpush1.msra.mxu0 0.0
      %1415 = vmatprep.subr.mxu0 0.0
      %1416 = vmatpush1.msra.mxu0 0.0
      %1417 = vmatprep.subr.mxu0 0.0
      %1418 = vmatpush1.msra.mxu0 0.0
      %1419 = vmatprep.subr.mxu0 0.0
      %1420 = vmatpush1.msra.mxu0 0.0
      %1421 = vmatprep.subr.mxu0 0.0
      %1422 = vmatpush1.msra.mxu0 0.0
      %1423 = vmatprep.subr.mxu0 0.0
      %1424 = vmatpush1.msra.mxu0 0.0
      %1425 = vmatprep.subr.mxu0 0.0
      %1426 = vmatpush1.msra.mxu0 0.0
      %1427 = vmatprep.subr.mxu0 0.0
      %1428 = vmatpush1.msra.mxu0 0.0
      %1429 = vmatprep.subr.mxu0 0.0
      %1430 = vmatpush1.msra.mxu0 0.0
      %1431 = vmatprep.subr.mxu0 0.0
      %1432 = vmatpush1.msra.mxu0 0.0
      %1433 = vmatprep.subr.mxu0 0.0
      %1434 = vmatpush1.msra.mxu0 0.0
      %1435 = vmatprep.subr.mxu0 0.0
      %1436 = vmatpush1.msra.mxu0 0.0
      %1437 = vmatprep.subr.mxu0 0.0
      %1438 = vmatpush1.msra.mxu0 0.0
      %1439 = vmatprep.subr.mxu0 0.0
      %1440 = vmatpush1.msra.mxu0 0.0
      %1441 = vmatprep.subr.mxu0 0.0
      %1442 = vmatpush1.msra.mxu0 0.0
      %1443 = vmatprep.subr.mxu0 0.0
      %1444 = vmatpush1.msra.mxu0 0.0
      %1445 = vmatprep.subr.mxu0 0.0
      %1446 = vmatpush1.msra.mxu0 0.0
      %1447 = vmatprep.subr.mxu0 0.0
      %1448 = vmatpush1.msra.mxu0 0.0
      %1449 = vmatprep.subr.mxu0 0.0
      %1450 = vmatpush1.msra.mxu0 0.0
      %1451 = vmatprep.subr.mxu0 0.0
      %1452 = vmatpush1.msra.mxu0 0.0
      %1453 = vmatprep.subr.mxu0 0.0
      %1454 = vmatpush1.msra.mxu0 0.0
      %1455 = vmatprep.subr.mxu0 0.0
      %1456 = vmatpush1.msra.mxu0 0.0
      %1457 = vmatprep.mubr.f32.mxu0 0.0
      %1458 = vmatmul.mubr.f32.gmra.mrb[0].mxu0 %v1391
      %v1459 = vpop.f32.mrb[0].mxu0
      %v1460 = vadd.f32 0.0, %v1459
      %v1461 = vpop.f32.mrb[0].mxu0
      %1462 = vdwg.mxu0
      %v1471 = vlaneseq
      %v1472 = vshrl.u32 %v1471, 7
      %v1473 = vsub.s32 %v1221, %v1472
      %v1474 = vrot.slane %v1070, %v1473
      %v1475 = vlaneseq
      %v1476 = vshrl.u32 %v1475, 7
      %v1477 = vsub.s32 %v1221, %v1476
      %v1478 = vrot.slane %v1073, %v1477
      %v1479 = vlaneseq
      %v1480 = vshrl.u32 %v1479, 7
      %v1481 = vsub.s32 %v1221, %v1480
      %v1482 = vrot.slane %v1076, %v1481
      %v1483 = vlaneseq
      %v1484 = vshrl.u32 %v1483, 7
      %v1485 = vsub.s32 %v1221, %v1484
      %v1486 = vrot.slane %v1079, %v1485
      %v1487 = vlaneseq
      %v1488 = vshrl.u32 %v1487, 7
      %v1489 = vsub.s32 %v1221, %v1488
      %v1490 = vrot.slane %v1082, %v1489
      %v1491 = vlaneseq
      %v1492 = vshrl.u32 %v1491, 7
      %v1493 = vsub.s32 %v1221, %v1492
      %v1494 = vrot.slane %v1085, %v1493
      %v1495 = vlaneseq
      %v1496 = vshrl.u32 %v1495, 7
      %v1497 = vsub.s32 %v1221, %v1496
      %v1498 = vrot.slane %v1088, %v1497
      %v1499 = vlaneseq
      %v1500 = vshrl.u32 %v1499, 7
      %v1501 = vsub.s32 %v1221, %v1500
      %v1502 = vrot.slane %v1091, %v1501
      %v1503 = vsel %vm1254, %v1478, %v1474
      %v1504 = vsel %vm1256, %v1482, %v1503
      %v1505 = vsel %vm1258, %v1486, %v1504
      %v1506 = vsel %vm1260, %v1490, %v1505
      %v1507 = vsel %vm1262, %v1494, %v1506
      %v1508 = vsel %vm1264, %v1498, %v1507
      %v1509 = vsel %vm1266, %v1502, %v1508
      %v1512 = vsel %vm1019, %v229, 0
      %1514 = vmatprep.subr.mxu0 0.0
      %1515 = vmatpush1.msra.mxu0 %v1509
      %1516 = vmatprep.subr.mxu0 0.0
      %1517 = vmatpush1.msra.mxu0 0.0
      %1518 = vmatprep.subr.mxu0 0.0
      %1519 = vmatpush1.msra.mxu0 0.0
      %1520 = vmatprep.subr.mxu0 0.0
      %1521 = vmatpush1.msra.mxu0 0.0
      %1522 = vmatprep.subr.mxu0 0.0
      %1523 = vmatpush1.msra.mxu0 0.0
      %1524 = vmatprep.subr.mxu0 0.0
      %1525 = vmatpush1.msra.mxu0 0.0
      %1526 = vmatprep.subr.mxu0 0.0
      %1527 = vmatpush1.msra.mxu0 0.0
      %1528 = vmatprep.subr.mxu0 0.0
      %1529 = vmatpush1.msra.mxu0 0.0
      %1530 = vmatprep.subr.mxu0 0.0
      %1531 = vmatpush1.msra.mxu0 0.0
      %1532 = vmatprep.subr.mxu0 0.0
      %1533 = vmatpush1.msra.mxu0 0.0
      %1534 = vmatprep.subr.mxu0 0.0
      %1535 = vmatpush1.msra.mxu0 0.0
      %1536 = vmatprep.subr.mxu0 0.0
      %1537 = vmatpush1.msra.mxu0 0.0
      %1538 = vmatprep.subr.mxu0 0.0
      %1539 = vmatpush1.msra.mxu0 0.0
      %1540 = vmatprep.subr.mxu0 0.0
      %1541 = vmatpush1.msra.mxu0 0.0
      %1542 = vmatprep.subr.mxu0 0.0
      %1543 = vmatpush1.msra.mxu0 0.0
      %1544 = vmatprep.subr.mxu0 0.0
      %1545 = vmatpush1.msra.mxu0 0.0
      %1546 = vmatprep.subr.mxu0 0.0
      %1547 = vmatpush1.msra.mxu0 0.0
      %1548 = vmatprep.subr.mxu0 0.0
      %1549 = vmatpush1.msra.mxu0 0.0
      %1550 = vmatprep.subr.mxu0 0.0
      %1551 = vmatpush1.msra.mxu0 0.0
      %1552 = vmatprep.subr.mxu0 0.0
      %1553 = vmatpush1.msra.mxu0 0.0
      %1554 = vmatprep.subr.mxu0 0.0
      %1555 = vmatpush1.msra.mxu0 0.0
      %1556 = vmatprep.subr.mxu0 0.0
      %1557 = vmatpush1.msra.mxu0 0.0
      %1558 = vmatprep.subr.mxu0 0.0
      %1559 = vmatpush1.msra.mxu0 0.0
      %1560 = vmatprep.subr.mxu0 0.0
      %1561 = vmatpush1.msra.mxu0 0.0
      %1562 = vmatprep.subr.mxu0 0.0
      %1563 = vmatpush1.msra.mxu0 0.0
      %1564 = vmatprep.subr.mxu0 0.0
      %1565 = vmatpush1.msra.mxu0 0.0
      %1566 = vmatprep.subr.mxu0 0.0
      %1567 = vmatpush1.msra.mxu0 0.0
      %1568 = vmatprep.subr.mxu0 0.0
      %1569 = vmatpush1.msra.mxu0 0.0
      %1570 = vmatprep.subr.mxu0 0.0
      %1571 = vmatpush1.msra.mxu0 0.0
      %1572 = vmatprep.subr.mxu0 0.0
      %1573 = vmatpush1.msra.mxu0 0.0
      %1574 = vmatprep.subr.mxu0 0.0
      %1575 = vmatpush1.msra.mxu0 0.0
      %1576 = vmatprep.subr.mxu0 0.0
      %1577 = vmatpush1.msra.mxu0 0.0
      %1578 = vmatprep.mubr.f32.mxu0 0.0
      %1579 = vmatmul.mubr.f32.gmra.mrb[0].mxu0 %v1512
      %v1580 = vpop.f32.mrb[0].mxu0
      %v1581 = vadd.f32 0.0, %v1580
      %v1582 = vpop.f32.mrb[0].mxu0
      %1583 = vdwg.mxu0
      %v1592 = vlaneseq
      %v1593 = vshrl.u32 %v1592, 7
      %v1594 = vsub.s32 %v1221, %v1593
      %v1595 = vrot.slane %v1094, %v1594
      %v1596 = vlaneseq
      %v1597 = vshrl.u32 %v1596, 7
      %v1598 = vsub.s32 %v1221, %v1597
      %v1599 = vrot.slane %v1097, %v1598
      %v1600 = vlaneseq
      %v1601 = vshrl.u32 %v1600, 7
      %v1602 = vsub.s32 %v1221, %v1601
      %v1603 = vrot.slane %v1100, %v1602
      %v1604 = vlaneseq
      %v1605 = vshrl.u32 %v1604, 7
      %v1606 = vsub.s32 %v1221, %v1605
      %v1607 = vrot.slane %v1103, %v1606
      %v1608 = vlaneseq
      %v1609 = vshrl.u32 %v1608, 7
      %v1610 = vsub.s32 %v1221, %v1609
      %v1611 = vrot.slane %v1106, %v1610
      %v1612 = vlaneseq
      %v1613 = vshrl.u32 %v1612, 7
      %v1614 = vsub.s32 %v1221, %v1613
      %v1615 = vrot.slane %v1109, %v1614
      %v1616 = vlaneseq
      %v1617 = vshrl.u32 %v1616, 7
      %v1618 = vsub.s32 %v1221, %v1617
      %v1619 = vrot.slane %v1112, %v1618
      %v1620 = vlaneseq
      %v1621 = vshrl.u32 %v1620, 7
      %v1622 = vsub.s32 %v1221, %v1621
      %v1623 = vrot.slane %v1115, %v1622
      %v1624 = vsel %vm1254, %v1599, %v1595
      %v1625 = vsel %vm1256, %v1603, %v1624
      %v1626 = vsel %vm1258, %v1607, %v1625
      %v1627 = vsel %vm1260, %v1611, %v1626
      %v1628 = vsel %vm1262, %v1615, %v1627
      %v1629 = vsel %vm1264, %v1619, %v1628
      %v1630 = vsel %vm1266, %v1623, %v1629
      %v1633 = vsel %vm1019, %v230, 0
      %1635 = vmatprep.subr.mxu0 0.0
      %1636 = vmatpush1.msra.mxu0 %v1630
      %1637 = vmatprep.subr.mxu0 0.0
      %1638 = vmatpush1.msra.mxu0 0.0
      %1639 = vmatprep.subr.mxu0 0.0
      %1640 = vmatpush1.msra.mxu0 0.0
      %1641 = vmatprep.subr.mxu0 0.0
      %1642 = vmatpush1.msra.mxu0 0.0
      %1643 = vmatprep.subr.mxu0 0.0
      %1644 = vmatpush1.msra.mxu0 0.0
      %1645 = vmatprep.subr.mxu0 0.0
      %1646 = vmatpush1.msra.mxu0 0.0
      %1647 = vmatprep.subr.mxu0 0.0
      %1648 = vmatpush1.msra.mxu0 0.0
      %1649 = vmatprep.subr.mxu0 0.0
      %1650 = vmatpush1.msra.mxu0 0.0
      %1651 = vmatprep.subr.mxu0 0.0
      %1652 = vmatpush1.msra.mxu0 0.0
      %1653 = vmatprep.subr.mxu0 0.0
      %1654 = vmatpush1.msra.mxu0 0.0
      %1655 = vmatprep.subr.mxu0 0.0
      %1656 = vmatpush1.msra.mxu0 0.0
      %1657 = vmatprep.subr.mxu0 0.0
      %1658 = vmatpush1.msra.mxu0 0.0
      %1659 = vmatprep.subr.mxu0 0.0
      %1660 = vmatpush1.msra.mxu0 0.0
      %1661 = vmatprep.subr.mxu0 0.0
      %1662 = vmatpush1.msra.mxu0 0.0
      %1663 = vmatprep.subr.mxu0 0.0
      %1664 = vmatpush1.msra.mxu0 0.0
      %1665 = vmatprep.subr.mxu0 0.0
      %1666 = vmatpush1.msra.mxu0 0.0
      %1667 = vmatprep.subr.mxu0 0.0
      %1668 = vmatpush1.msra.mxu0 0.0
      %1669 = vmatprep.subr.mxu0 0.0
      %1670 = vmatpush1.msra.mxu0 0.0
      %1671 = vmatprep.subr.mxu0 0.0
      %1672 = vmatpush1.msra.mxu0 0.0
      %1673 = vmatprep.subr.mxu0 0.0
      %1674 = vmatpush1.msra.mxu0 0.0
      %1675 = vmatprep.subr.mxu0 0.0
      %1676 = vmatpush1.msra.mxu0 0.0
      %1677 = vmatprep.subr.mxu0 0.0
      %1678 = vmatpush1.msra.mxu0 0.0
      %1679 = vmatprep.subr.mxu0 0.0
      %1680 = vmatpush1.msra.mxu0 0.0
      %1681 = vmatprep.subr.mxu0 0.0
      %1682 = vmatpush1.msra.mxu0 0.0
      %1683 = vmatprep.subr.mxu0 0.0
      %1684 = vmatpush1.msra.mxu0 0.0
      %1685 = vmatprep.subr.mxu0 0.0
      %1686 = vmatpush1.msra.mxu0 0.0
      %1687 = vmatprep.subr.mxu0 0.0
      %1688 = vmatpush1.msra.mxu0 0.0
      %1689 = vmatprep.subr.mxu0 0.0
      %1690 = vmatpush1.msra.mxu0 0.0
      %1691 = vmatprep.subr.mxu0 0.0
      %1692 = vmatpush1.msra.mxu0 0.0
      %1693 = vmatprep.subr.mxu0 0.0
      %1694 = vmatpush1.msra.mxu0 0.0
      %1695 = vmatprep.subr.mxu0 0.0
      %1696 = vmatpush1.msra.mxu0 0.0
      %1697 = vmatprep.subr.mxu0 0.0
      %1698 = vmatpush1.msra.mxu0 0.0
      %1699 = vmatprep.mubr.f32.mxu0 0.0
      %1700 = vmatmul.mubr.f32.gmra.mrb[0].mxu0 %v1633
      %v1701 = vpop.f32.mrb[0].mxu0
      %v1702 = vadd.f32 0.0, %v1701
      %v1703 = vpop.f32.mrb[0].mxu0
      %1704 = vdwg.mxu0
      %v1713 = vlaneseq
      %v1714 = vshrl.u32 %v1713, 7
      %v1715 = vsub.s32 %v1221, %v1714
      %v1716 = vrot.slane %v1118, %v1715
      %v1717 = vlaneseq
      %v1718 = vshrl.u32 %v1717, 7
      %v1719 = vsub.s32 %v1221, %v1718
      %v1720 = vrot.slane %v1121, %v1719
      %v1721 = vlaneseq
      %v1722 = vshrl.u32 %v1721, 7
      %v1723 = vsub.s32 %v1221, %v1722
      %v1724 = vrot.slane %v1124, %v1723
      %v1725 = vlaneseq
      %v1726 = vshrl.u32 %v1725, 7
      %v1727 = vsub.s32 %v1221, %v1726
      %v1728 = vrot.slane %v1127, %v1727
      %v1729 = vlaneseq
      %v1730 = vshrl.u32 %v1729, 7
      %v1731 = vsub.s32 %v1221, %v1730
      %v1732 = vrot.slane %v1130, %v1731
      %v1733 = vlaneseq
      %v1734 = vshrl.u32 %v1733, 7
      %v1735 = vsub.s32 %v1221, %v1734
      %v1736 = vrot.slane %v1133, %v1735
      %v1737 = vlaneseq
      %v1738 = vshrl.u32 %v1737, 7
      %v1739 = vsub.s32 %v1221, %v1738
      %v1740 = vrot.slane %v1136, %v1739
      %v1741 = vlaneseq
      %v1742 = vshrl.u32 %v1741, 7
      %v1743 = vsub.s32 %v1221, %v1742
      %v1744 = vrot.slane %v1139, %v1743
      %v1745 = vsel %vm1254, %v1720, %v1716
      %v1746 = vsel %vm1256, %v1724, %v1745
      %v1747 = vsel %vm1258, %v1728, %v1746
      %v1748 = vsel %vm1260, %v1732, %v1747
      %v1749 = vsel %vm1262, %v1736, %v1748
      %v1750 = vsel %vm1264, %v1740, %v1749
      %v1751 = vsel %vm1266, %v1744, %v1750
      %v1754 = vsel %vm1019, %v231, 0
      %1756 = vmatprep.subr.mxu0 0.0
      %1757 = vmatpush1.msra.mxu0 %v1751
      %1758 = vmatprep.subr.mxu0 0.0
      %1759 = vmatpush1.msra.mxu0 0.0
      %1760 = vmatprep.subr.mxu0 0.0
      %1761 = vmatpush1.msra.mxu0 0.0
      %1762 = vmatprep.subr.mxu0 0.0
      %1763 = vmatpush1.msra.mxu0 0.0
      %1764 = vmatprep.subr.mxu0 0.0
      %1765 = vmatpush1.msra.mxu0 0.0
      %1766 = vmatprep.subr.mxu0 0.0
      %1767 = vmatpush1.msra.mxu0 0.0
      %1768 = vmatprep.subr.mxu0 0.0
      %1769 = vmatpush1.msra.mxu0 0.0
      %1770 = vmatprep.subr.mxu0 0.0
      %1771 = vmatpush1.msra.mxu0 0.0
      %1772 = vmatprep.subr.mxu0 0.0
      %1773 = vmatpush1.msra.mxu0 0.0
      %1774 = vmatprep.subr.mxu0 0.0
      %1775 = vmatpush1.msra.mxu0 0.0
      %1776 = vmatprep.subr.mxu0 0.0
      %1777 = vmatpush1.msra.mxu0 0.0
      %1778 = vmatprep.subr.mxu0 0.0
      %1779 = vmatpush1.msra.mxu0 0.0
      %1780 = vmatprep.subr.mxu0 0.0
      %1781 = vmatpush1.msra.mxu0 0.0
      %1782 = vmatprep.subr.mxu0 0.0
      %1783 = vmatpush1.msra.mxu0 0.0
      %1784 = vmatprep.subr.mxu0 0.0
      %1785 = vmatpush1.msra.mxu0 0.0
      %1786 = vmatprep.subr.mxu0 0.0
      %1787 = vmatpush1.msra.mxu0 0.0
      %1788 = vmatprep.subr.mxu0 0.0
      %1789 = vmatpush1.msra.mxu0 0.0
      %1790 = vmatprep.subr.mxu0 0.0
      %1791 = vmatpush1.msra.mxu0 0.0
      %1792 = vmatprep.subr.mxu0 0.0
      %1793 = vmatpush1.msra.mxu0 0.0
      %1794 = vmatprep.subr.mxu0 0.0
      %1795 = vmatpush1.msra.mxu0 0.0
      %1796 = vmatprep.subr.mxu0 0.0
      %1797 = vmatpush1.msra.mxu0 0.0
      %1798 = vmatprep.subr.mxu0 0.0
      %1799 = vmatpush1.msra.mxu0 0.0
      %1800 = vmatprep.subr.mxu0 0.0
      %1801 = vmatpush1.msra.mxu0 0.0
      %1802 = vmatprep.subr.mxu0 0.0
      %1803 = vmatpush1.msra.mxu0 0.0
      %1804 = vmatprep.subr.mxu0 0.0
      %1805 = vmatpush1.msra.mxu0 0.0
      %1806 = vmatprep.subr.mxu0 0.0
      %1807 = vmatpush1.msra.mxu0 0.0
      %1808 = vmatprep.subr.mxu0 0.0
      %1809 = vmatpush1.msra.mxu0 0.0
      %1810 = vmatprep.subr.mxu0 0.0
      %1811 = vmatpush1.msra.mxu0 0.0
      %1812 = vmatprep.subr.mxu0 0.0
      %1813 = vmatpush1.msra.mxu0 0.0
      %1814 = vmatprep.subr.mxu0 0.0
      %1815 = vmatpush1.msra.mxu0 0.0
      %1816 = vmatprep.subr.mxu0 0.0
      %1817 = vmatpush1.msra.mxu0 0.0
      %1818 = vmatprep.subr.mxu0 0.0
      %1819 = vmatpush1.msra.mxu0 0.0
      %1820 = vmatprep.mubr.f32.mxu0 0.0
      %1821 = vmatmul.mubr.f32.gmra.mrb[0].mxu0 %v1754
      %v1822 = vpop.f32.mrb[0].mxu0
      %v1823 = vadd.f32 0.0, %v1822
      %v1824 = vpop.f32.mrb[0].mxu0
      %1825 = vdwg.mxu0
      %v1834 = vlaneseq
      %v1835 = vshrl.u32 %v1834, 7
      %v1836 = vsub.s32 %v1221, %v1835
      %v1837 = vrot.slane %v1142, %v1836
      %v1838 = vlaneseq
      %v1839 = vshrl.u32 %v1838, 7
      %v1840 = vsub.s32 %v1221, %v1839
      %v1841 = vrot.slane %v1145, %v1840
      %v1842 = vlaneseq
      %v1843 = vshrl.u32 %v1842, 7
      %v1844 = vsub.s32 %v1221, %v1843
      %v1845 = vrot.slane %v1148, %v1844
      %v1846 = vlaneseq
      %v1847 = vshrl.u32 %v1846, 7
      %v1848 = vsub.s32 %v1221, %v1847
      %v1849 = vrot.slane %v1151, %v1848
      %v1850 = vlaneseq
      %v1851 = vshrl.u32 %v1850, 7
      %v1852 = vsub.s32 %v1221, %v1851
      %v1853 = vrot.slane %v1154, %v1852
      %v1854 = vlaneseq
      %v1855 = vshrl.u32 %v1854, 7
      %v1856 = vsub.s32 %v1221, %v1855
      %v1857 = vrot.slane %v1157, %v1856
      %v1858 = vlaneseq
      %v1859 = vshrl.u32 %v1858, 7
      %v1860 = vsub.s32 %v1221, %v1859
      %v1861 = vrot.slane %v1160, %v1860
      %v1862 = vlaneseq
      %v1863 = vshrl.u32 %v1862, 7
      %v1864 = vsub.s32 %v1221, %v1863
      %v1865 = vrot.slane %v1163, %v1864
      %v1866 = vsel %vm1254, %v1841, %v1837
      %v1867 = vsel %vm1256, %v1845, %v1866
      %v1868 = vsel %vm1258, %v1849, %v1867
      %v1869 = vsel %vm1260, %v1853, %v1868
      %v1870 = vsel %vm1262, %v1857, %v1869
      %v1871 = vsel %vm1264, %v1861, %v1870
      %v1872 = vsel %vm1266, %v1865, %v1871
      %v1875 = vsel %vm1019, %v232, 0
      %1877 = vmatprep.subr.mxu0 0.0
      %1878 = vmatpush1.msra.mxu0 %v1872
      %1879 = vmatprep.subr.mxu0 0.0
      %1880 = vmatpush1.msra.mxu0 0.0
      %1881 = vmatprep.subr.mxu0 0.0
      %1882 = vmatpush1.msra.mxu0 0.0
      %1883 = vmatprep.subr.mxu0 0.0
      %1884 = vmatpush1.msra.mxu0 0.0
      %1885 = vmatprep.subr.mxu0 0.0
      %1886 = vmatpush1.msra.mxu0 0.0
      %1887 = vmatprep.subr.mxu0 0.0
      %1888 = vmatpush1.msra.mxu0 0.0
      %1889 = vmatprep.subr.mxu0 0.0
      %1890 = vmatpush1.msra.mxu0 0.0
      %1891 = vmatprep.subr.mxu0 0.0
      %1892 = vmatpush1.msra.mxu0 0.0
      %1893 = vmatprep.subr.mxu0 0.0
      %1894 = vmatpush1.msra.mxu0 0.0
      %1895 = vmatprep.subr.mxu0 0.0
      %1896 = vmatpush1.msra.mxu0 0.0
      %1897 = vmatprep.subr.mxu0 0.0
      %1898 = vmatpush1.msra.mxu0 0.0
      %1899 = vmatprep.subr.mxu0 0.0
      %1900 = vmatpush1.msra.mxu0 0.0
      %1901 = vmatprep.subr.mxu0 0.0
      %1902 = vmatpush1.msra.mxu0 0.0
      %1903 = vmatprep.subr.mxu0 0.0
      %1904 = vmatpush1.msra.mxu0 0.0
      %1905 = vmatprep.subr.mxu0 0.0
      %1906 = vmatpush1.msra.mxu0 0.0
      %1907 = vmatprep.subr.mxu0 0.0
      %1908 = vmatpush1.msra.mxu0 0.0
      %1909 = vmatprep.subr.mxu0 0.0
      %1910 = vmatpush1.msra.mxu0 0.0
      %1911 = vmatprep.subr.mxu0 0.0
      %1912 = vmatpush1.msra.mxu0 0.0
      %1913 = vmatprep.subr.mxu0 0.0
      %1914 = vmatpush1.msra.mxu0 0.0
      %1915 = vmatprep.subr.mxu0 0.0
      %1916 = vmatpush1.msra.mxu0 0.0
      %1917 = vmatprep.subr.mxu0 0.0
      %1918 = vmatpush1.msra.mxu0 0.0
      %1919 = vmatprep.subr.mxu0 0.0
      %1920 = vmatpush1.msra.mxu0 0.0
      %1921 = vmatprep.subr.mxu0 0.0
      %1922 = vmatpush1.msra.mxu0 0.0
      %1923 = vmatprep.subr.mxu0 0.0
      %1924 = vmatpush1.msra.mxu0 0.0
      %1925 = vmatprep.subr.mxu0 0.0
      %1926 = vmatpush1.msra.mxu0 0.0
      %1927 = vmatprep.subr.mxu0 0.0
      %1928 = vmatpush1.msra.mxu0 0.0
      %1929 = vmatprep.subr.mxu0 0.0
      %1930 = vmatpush1.msra.mxu0 0.0
      %1931 = vmatprep.subr.mxu0 0.0
      %1932 = vmatpush1.msra.mxu0 0.0
      %1933 = vmatprep.subr.mxu0 0.0
      %1934 = vmatpush1.msra.mxu0 0.0
      %1935 = vmatprep.subr.mxu0 0.0
      %1936 = vmatpush1.msra.mxu0 0.0
      %1937 = vmatprep.subr.mxu0 0.0
      %1938 = vmatpush1.msra.mxu0 0.0
      %1939 = vmatprep.subr.mxu0 0.0
      %1940 = vmatpush1.msra.mxu0 0.0
      %1941 = vmatprep.mubr.f32.mxu0 0.0
      %1942 = vmatmul.mubr.f32.gmra.mrb[0].mxu0 %v1875
      %v1943 = vpop.f32.mrb[0].mxu0
      %v1944 = vadd.f32 0.0, %v1943
      %v1945 = vpop.f32.mrb[0].mxu0
      %1946 = vdwg.mxu0
      %v1955 = vlaneseq
      %v1956 = vshrl.u32 %v1955, 7
      %v1957 = vsub.s32 %v1221, %v1956
      %v1958 = vrot.slane %v1166, %v1957
      %v1959 = vlaneseq
      %v1960 = vshrl.u32 %v1959, 7
      %v1961 = vsub.s32 %v1221, %v1960
      %v1962 = vrot.slane %v1169, %v1961
      %v1963 = vlaneseq
      %v1964 = vshrl.u32 %v1963, 7
      %v1965 = vsub.s32 %v1221, %v1964
      %v1966 = vrot.slane %v1172, %v1965
      %v1967 = vlaneseq
      %v1968 = vshrl.u32 %v1967, 7
      %v1969 = vsub.s32 %v1221, %v1968
      %v1970 = vrot.slane %v1175, %v1969
      %v1971 = vlaneseq
      %v1972 = vshrl.u32 %v1971, 7
      %v1973 = vsub.s32 %v1221, %v1972
      %v1974 = vrot.slane %v1178, %v1973
      %v1975 = vlaneseq
      %v1976 = vshrl.u32 %v1975, 7
      %v1977 = vsub.s32 %v1221, %v1976
      %v1978 = vrot.slane %v1181, %v1977
      %v1979 = vlaneseq
      %v1980 = vshrl.u32 %v1979, 7
      %v1981 = vsub.s32 %v1221, %v1980
      %v1982 = vrot.slane %v1184, %v1981
      %v1983 = vlaneseq
      %v1984 = vshrl.u32 %v1983, 7
      %v1985 = vsub.s32 %v1221, %v1984
      %v1986 = vrot.slane %v1187, %v1985
      %v1987 = vsel %vm1254, %v1962, %v1958
      %v1988 = vsel %vm1256, %v1966, %v1987
      %v1989 = vsel %vm1258, %v1970, %v1988
      %v1990 = vsel %vm1260, %v1974, %v1989
      %v1991 = vsel %vm1262, %v1978, %v1990
      %v1992 = vsel %vm1264, %v1982, %v1991
      %v1993 = vsel %vm1266, %v1986, %v1992
      %v1996 = vsel %vm1019, %v233, 0
      %1998 = vmatprep.subr.mxu0 0.0
      %1999 = vmatpush1.msra.mxu0 %v1993
      %2000 = vmatprep.subr.mxu0 0.0
      %2001 = vmatpush1.msra.mxu0 0.0
      %2002 = vmatprep.subr.mxu0 0.0
      %2003 = vmatpush1.msra.mxu0 0.0
      %2004 = vmatprep.subr.mxu0 0.0
      %2005 = vmatpush1.msra.mxu0 0.0
      %2006 = vmatprep.subr.mxu0 0.0
      %2007 = vmatpush1.msra.mxu0 0.0
      %2008 = vmatprep.subr.mxu0 0.0
      %2009 = vmatpush1.msra.mxu0 0.0
      %2010 = vmatprep.subr.mxu0 0.0
      %2011 = vmatpush1.msra.mxu0 0.0
      %2012 = vmatprep.subr.mxu0 0.0
      %2013 = vmatpush1.msra.mxu0 0.0
      %2014 = vmatprep.subr.mxu0 0.0
      %2015 = vmatpush1.msra.mxu0 0.0
      %2016 = vmatprep.subr.mxu0 0.0
      %2017 = vmatpush1.msra.mxu0 0.0
      %2018 = vmatprep.subr.mxu0 0.0
      %2019 = vmatpush1.msra.mxu0 0.0
      %2020 = vmatprep.subr.mxu0 0.0
      %2021 = vmatpush1.msra.mxu0 0.0
      %2022 = vmatprep.subr.mxu0 0.0
      %2023 = vmatpush1.msra.mxu0 0.0
      %2024 = vmatprep.subr.mxu0 0.0
      %2025 = vmatpush1.msra.mxu0 0.0
      %2026 = vmatprep.subr.mxu0 0.0
      %2027 = vmatpush1.msra.mxu0 0.0
      %2028 = vmatprep.subr.mxu0 0.0
      %2029 = vmatpush1.msra.mxu0 0.0
      %2030 = vmatprep.subr.mxu0 0.0
      %2031 = vmatpush1.msra.mxu0 0.0
      %2032 = vmatprep.subr.mxu0 0.0
      %2033 = vmatpush1.msra.mxu0 0.0
      %2034 = vmatprep.subr.mxu0 0.0
      %2035 = vmatpush1.msra.mxu0 0.0
      %2036 = vmatprep.subr.mxu0 0.0
      %2037 = vmatpush1.msra.mxu0 0.0
      %2038 = vmatprep.subr.mxu0 0.0
      %2039 = vmatpush1.msra.mxu0 0.0
      %2040 = vmatprep.subr.mxu0 0.0
      %2041 = vmatpush1.msra.mxu0 0.0
      %2042 = vmatprep.subr.mxu0 0.0
      %2043 = vmatpush1.msra.mxu0 0.0
      %2044 = vmatprep.subr.mxu0 0.0
      %2045 = vmatpush1.msra.mxu0 0.0
      %2046 = vmatprep.subr.mxu0 0.0
      %2047 = vmatpush1.msra.mxu0 0.0
      %2048 = vmatprep.subr.mxu0 0.0
      %2049 = vmatpush1.msra.mxu0 0.0
      %2050 = vmatprep.subr.mxu0 0.0
      %2051 = vmatpush1.msra.mxu0 0.0
      %2052 = vmatprep.subr.mxu0 0.0
      %2053 = vmatpush1.msra.mxu0 0.0
      %2054 = vmatprep.subr.mxu0 0.0
      %2055 = vmatpush1.msra.mxu0 0.0
      %2056 = vmatprep.subr.mxu0 0.0
      %2057 = vmatpush1.msra.mxu0 0.0
      %2058 = vmatprep.subr.mxu0 0.0
      %2059 = vmatpush1.msra.mxu0 0.0
      %2060 = vmatprep.subr.mxu0 0.0
      %2061 = vmatpush1.msra.mxu0 0.0
      %2062 = vmatprep.mubr.f32.mxu0 0.0
      %2063 = vmatmul.mubr.f32.gmra.mrb[0].mxu0 %v1996
      %v2064 = vpop.f32.mrb[0].mxu0
      %v2065 = vadd.f32 0.0, %v2064
      %v2066 = vpop.f32.mrb[0].mxu0
      %2067 = vdwg.mxu0
      %v2076 = vlaneseq
      %v2077 = vshrl.u32 %v2076, 7
      %v2078 = vsub.s32 %v1221, %v2077
      %v2079 = vrot.slane %v1190, %v2078
      %v2080 = vlaneseq
      %v2081 = vshrl.u32 %v2080, 7
      %v2082 = vsub.s32 %v1221, %v2081
      %v2083 = vrot.slane %v1193, %v2082
      %v2084 = vlaneseq
      %v2085 = vshrl.u32 %v2084, 7
      %v2086 = vsub.s32 %v1221, %v2085
      %v2087 = vrot.slane %v1196, %v2086
      %v2088 = vlaneseq
      %v2089 = vshrl.u32 %v2088, 7
      %v2090 = vsub.s32 %v1221, %v2089
      %v2091 = vrot.slane %v1199, %v2090
      %v2092 = vlaneseq
      %v2093 = vshrl.u32 %v2092, 7
      %v2094 = vsub.s32 %v1221, %v2093
      %v2095 = vrot.slane %v1202, %v2094
      %v2096 = vlaneseq
      %v2097 = vshrl.u32 %v2096, 7
      %v2098 = vsub.s32 %v1221, %v2097
      %v2099 = vrot.slane %v1205, %v2098
      %v2100 = vlaneseq
      %v2101 = vshrl.u32 %v2100, 7
      %v2102 = vsub.s32 %v1221, %v2101
      %v2103 = vrot.slane %v1208, %v2102
      %v2104 = vlaneseq
      %v2105 = vshrl.u32 %v2104, 7
      %v2106 = vsub.s32 %v1221, %v2105
      %v2107 = vrot.slane %v1211, %v2106
      %v2108 = vsel %vm1254, %v2083, %v2079
      %v2109 = vsel %vm1256, %v2087, %v2108
      %v2110 = vsel %vm1258, %v2091, %v2109
      %v2111 = vsel %vm1260, %v2095, %v2110
      %v2112 = vsel %vm1262, %v2099, %v2111
      %v2113 = vsel %vm1264, %v2103, %v2112
      %v2114 = vsel %vm1266, %v2107, %v2113
      %v2117 = vsel %vm1019, %v234, 0
      %2119 = vmatprep.subr.mxu0 0.0
      %2120 = vmatpush1.msra.mxu0 %v2114
      %2121 = vmatprep.subr.mxu0 0.0
      %2122 = vmatpush1.msra.mxu0 0.0
      %2123 = vmatprep.subr.mxu0 0.0
      %2124 = vmatpush1.msra.mxu0 0.0
      %2125 = vmatprep.subr.mxu0 0.0
      %2126 = vmatpush1.msra.mxu0 0.0
      %2127 = vmatprep.subr.mxu0 0.0
      %2128 = vmatpush1.msra.mxu0 0.0
      %2129 = vmatprep.subr.mxu0 0.0
      %2130 = vmatpush1.msra.mxu0 0.0
      %2131 = vmatprep.subr.mxu0 0.0
      %2132 = vmatpush1.msra.mxu0 0.0
      %2133 = vmatprep.subr.mxu0 0.0
      %2134 = vmatpush1.msra.mxu0 0.0
      %2135 = vmatprep.subr.mxu0 0.0
      %2136 = vmatpush1.msra.mxu0 0.0
      %2137 = vmatprep.subr.mxu0 0.0
      %2138 = vmatpush1.msra.mxu0 0.0
      %2139 = vmatprep.subr.mxu0 0.0
      %2140 = vmatpush1.msra.mxu0 0.0
      %2141 = vmatprep.subr.mxu0 0.0
      %2142 = vmatpush1.msra.mxu0 0.0
      %2143 = vmatprep.subr.mxu0 0.0
      %2144 = vmatpush1.msra.mxu0 0.0
      %2145 = vmatprep.subr.mxu0 0.0
      %2146 = vmatpush1.msra.mxu0 0.0
      %2147 = vmatprep.subr.mxu0 0.0
      %2148 = vmatpush1.msra.mxu0 0.0
      %2149 = vmatprep.subr.mxu0 0.0
      %2150 = vmatpush1.msra.mxu0 0.0
      %2151 = vmatprep.subr.mxu0 0.0
      %2152 = vmatpush1.msra.mxu0 0.0
      %2153 = vmatprep.subr.mxu0 0.0
      %2154 = vmatpush1.msra.mxu0 0.0
      %2155 = vmatprep.subr.mxu0 0.0
      %2156 = vmatpush1.msra.mxu0 0.0
      %2157 = vmatprep.subr.mxu0 0.0
      %2158 = vmatpush1.msra.mxu0 0.0
      %2159 = vmatprep.subr.mxu0 0.0
      %2160 = vmatpush1.msra.mxu0 0.0
      %2161 = vmatprep.subr.mxu0 0.0
      %2162 = vmatpush1.msra.mxu0 0.0
      %2163 = vmatprep.subr.mxu0 0.0
      %2164 = vmatpush1.msra.mxu0 0.0
      %2165 = vmatprep.subr.mxu0 0.0
      %2166 = vmatpush1.msra.mxu0 0.0
      %2167 = vmatprep.subr.mxu0 0.0
      %2168 = vmatpush1.msra.mxu0 0.0
      %2169 = vmatprep.subr.mxu0 0.0
      %2170 = vmatpush1.msra.mxu0 0.0
      %2171 = vmatprep.subr.mxu0 0.0
      %2172 = vmatpush1.msra.mxu0 0.0
      %2173 = vmatprep.subr.mxu0 0.0
      %2174 = vmatpush1.msra.mxu0 0.0
      %2175 = vmatprep.subr.mxu0 0.0
      %2176 = vmatpush1.msra.mxu0 0.0
      %2177 = vmatprep.subr.mxu0 0.0
      %2178 = vmatpush1.msra.mxu0 0.0
      %2179 = vmatprep.subr.mxu0 0.0
      %2180 = vmatpush1.msra.mxu0 0.0
      %2181 = vmatprep.subr.mxu0 0.0
      %2182 = vmatpush1.msra.mxu0 0.0
      %2183 = vmatprep.mubr.f32.mxu0 0.0
      %2184 = vmatmul.mubr.f32.gmra.mrb[0].mxu0 %v2117
      %v2185 = vpop.f32.mrb[0].mxu0
      %v2186 = vadd.f32 0.0, %v2185
      %v2187 = vpop.f32.mrb[0].mxu0
      %2188 = vdwg.mxu0
      %2189 = vst.msk [vmem:[%s210] sm:$0xff] %vm1019, %v1339
      %2190 = vst.msk [vmem:[%s210 + $0x8] sm:$0xff] %vm1019, %v1460
      %2191 = vst.msk [vmem:[%s210 + $0x10] sm:$0xff] %vm1019, %v1581
      %2192 = vst.msk [vmem:[%s210 + $0x18] sm:$0xff] %vm1019, %v1702
      %2193 = vst.msk [vmem:[%s210 + $0x20] sm:$0xff] %vm1019, %v1823
      %2194 = vst.msk [vmem:[%s210 + $0x28] sm:$0xff] %vm1019, %v1944
      %2195 = vst.msk [vmem:[%s210 + $0x30] sm:$0xff] %vm1019, %v2065
      %2196 = vst.msk [vmem:[%s210 + $0x38] sm:$0xff] %vm1019, %v2186
      %p2197 = scmp.lt.s32.totalorder %s14, 1
      %s2198 = scalar_select %p2197, %s14, 1
      %s2199 = smul.addr %s2198, 8
      %s2200 = smul.addr %s2199, 8
      %s2201 = scalar_lea.vmem %s3, %s2200
      // Predicated region
      $region33: #{sdp_like.1} parent=31 // pred_check
        %p2202 = pneg %p110
      $region34: #{sdp_like.1} parent=31 // pred_check_branch
        %2204 = sbr.rel (%p2202) target = $region36
      $region35: #{sdp_like.1} parent=31 // pred_region
        _
      $region36: #{sdp_like.1} parent=31 // pred_fallthru
        _
    $region32: #{sdp_like.1} parent=5 // pred_fallthru
      _
    %p2205 = scmp.le.s32.totalorder 2, %s9
    // Predicated region
    $region37: #{sdp_like.1} parent=5 // pred_check
      %p2206 = pneg %p2205
    $region38: #{sdp_like.1} parent=5 // pred_check_branch
      %2208 = sbr.rel (%p2206) target = $region40
    $region39: #{sdp_like.1} parent=5 // pred_region
      %s2209 = ssub.s32 %s9, 2
      // Predicated region
      $region41: #{sdp_like.1} parent=39 // pred_check
        %p2210 = pneg %p116
      $region42: #{sdp_like.1} parent=39 // pred_check_branch
        %2212 = sbr.rel (%p2210) target = $region44
      $region43: #{sdp_like.1} parent=39 // pred_region
        %p2213 = scmp.lt.s32.totalorder %s15, 1
        %s2214 = scalar_select %p2213, %s15, 1
        %s2215 = smul.addr %s2214, 8
        %s2216 = smul.addr %s2215, 8
        %s2217 = scalar_lea.vmem %s3, %s2216
      $region44: #{sdp_like.1} parent=39 // pred_fallthru
        _
    $region40: #{sdp_like.1} parent=5 // pred_fallthru
      _
  $region6: #{sdp_like.1} parent=0 // loop_footer
    %s13 = sadd.s32 1, %s9
  $region7: #{sdp_like.1} parent=0 // loop_footer_branch
    %8 = sbr.rel target = $region3
  $region8: #{sdp_like.1} parent=0 // loop_exit
    _

</llo_original>
